<compile_context>
chip_gen: v7x
topology: tpu7x:2x2x1
jax: 0.10.0
libtpu: 0.0.40
codegen_flags: <defaults>
</compile_context>

<pallas_src>
import math

import jax
import jax.numpy as jnp
from jax.experimental import pallas as pl
from jax.experimental.pallas import tpu as pltpu


# ------------------------------------------------------------------- kernel --

def make_encoder_kernel(num_heads, use_mask):
    """Fused kernel: one (batch, layer) grid step = one full EncoderLayer."""

    def kernel(*refs):
        if use_mask:
            (x_ref, mask_ref,
             wq_w, wq_b, wo_w, wo_b,
             ln1_g, ln1_b, f1_w, f1_b, f2_w, f2_b, ln2_g, ln2_b,
             out_ref) = refs
        else:
            (x_ref,
             wq_w, wq_b, wo_w, wo_b,
             ln1_g, ln1_b, f1_w, f1_b, f2_w, f2_b, ln2_g, ln2_b,
             out_ref) = refs
            mask_ref = None

        layer = pl.program_id(1)

        # Layer 0: seed the resident output block with the input; it then acts
        # as the residual-stream carry across the (arbitrary) layer axis.
        @pl.when(layer == 0)
        def _():
            out_ref[...] = x_ref[...]

        x = out_ref[0]                       # (L, D) current residual stream
        L, D = x.shape
        depth = D // num_heads
        scale = depth ** -0.5

        def linear(v, w_ref, b_ref):
            # v: (M, in); W stored PyTorch-style (out, in): contract last dims
            # directly on the MXU (no .T / relayout of the weight block).
            return (jax.lax.dot_general(
                        v, w_ref[0],
                        dimension_numbers=(((1,), (1,)), ((), ())),
                        preferred_element_type=jnp.float32)
                    + b_ref[0])

        def layer_norm(v, g_ref, b_ref):
            mu = jnp.mean(v, axis=-1, keepdims=True)
            var = jnp.mean(jnp.square(v - mu), axis=-1, keepdims=True)
            return (v - mu) * jax.lax.rsqrt(var + 1e-5) * g_ref[0] + b_ref[0]

        # ---- multi-head attention (reference bug: keys == values == q_proj) --
        qp = linear(x, wq_w, wq_b)           # (L, D)
        head_outs = []
        for h in range(num_heads):           # static unroll, all heads in-step
            qh = qp[:, h * depth:(h + 1) * depth]          # (L, depth)
            s = jax.lax.dot_general(
                qh, qh, dimension_numbers=(((1,), (1,)), ((), ())),
                preferred_element_type=jnp.float32) * scale  # q @ q^T
            if use_mask:
                s = s + mask_ref[0, h] * (-1000000000.0)
            s = s - jnp.max(s, axis=-1, keepdims=True)
            e = jnp.exp(s)
            p = e * pl.reciprocal(jnp.sum(e, axis=-1, keepdims=True),
                                  approx=True)
            head_outs.append(jnp.dot(p, qh,
                                     preferred_element_type=jnp.float32))
        merged = jnp.concatenate(head_outs, axis=-1)        # (L, D)
        attn_out = linear(merged, wo_w, wo_b)

        # dropout -> identity (inference); residual + LayerNorm 1
        y1 = layer_norm(x + attn_out, ln1_g, ln1_b)

        # ---- point-wise feed-forward ----------------------------------------
        hdn = jnp.maximum(linear(y1, f1_w, f1_b), 0.0)      # ReLU
        ffn_out = linear(hdn, f2_w, f2_b)

        # dropout -> identity; residual + LayerNorm 2; write carry/output
        out_ref[0] = layer_norm(y1 + ffn_out, ln2_g, ln2_b)

    return kernel


# --------------------------------------------------------------------- glue --

_PARAM_ORDER = ("wq_w", "wq_b", "wo_w", "wo_b",
                "ln1_g", "ln1_b", "f1_w", "f1_b",
                "f2_w", "f2_b", "ln2_g", "ln2_b")


def encoder_forward(params, x, mask, num_heads):
    N, L, D = x.shape
    num_layers = params["wq_w"].shape[0]
    H = num_heads
    use_mask = mask is not None

    kernel = make_encoder_kernel(num_heads, use_mask)

    batch_map = lambda i, l: (i, 0, 0)       # per-batch block, constant over layers
    layer_map = lambda i, l: (l, 0, 0)       # per-layer stacked parameters

    in_specs = [pl.BlockSpec((1, L, D), batch_map)]
    inputs = [x.astype(jnp.float32)]
    if use_mask:
        in_specs.append(pl.BlockSpec((1, H, L, L), lambda i, l: (i, 0, 0, 0)))
        inputs.append(mask.astype(jnp.float32))
    for name in _PARAM_ORDER:
        p = params[name]
        in_specs.append(pl.BlockSpec((1,) + p.shape[1:], layer_map))
        inputs.append(p)

    return pl.pallas_call(
        kernel,
        grid=(N, num_layers),
        out_shape=jax.ShapeDtypeStruct((N, L, D), jnp.float32),
        in_specs=in_specs,
        out_specs=pl.BlockSpec((1, L, D), batch_map),
        compiler_params=pltpu.CompilerParams(
            dimension_semantics=("parallel", "arbitrary")),
    )(*inputs)


def init_params(key, num_layers, d_model, dff):
    """PyTorch-style deterministic init.  wk/wv are intentionally omitted:
    the reference module computes them but (due to its replicated bug) they
    never influence the output."""

    def linear_init(k, fan_in, fan_out):
        kw, kb = jax.random.split(k)
        bound = 1.0 / math.sqrt(fan_in)
        w = jax.random.uniform(kw, (fan_out, fan_in), jnp.float32, -bound, bound)
        b = jax.random.uniform(kb, (fan_out,), jnp.float32, -bound, bound)
        return w, b[None, :]                 # bias stored (1, out) for TPU tiling

    acc = {k: [] for k in _PARAM_ORDER}
    for _ in range(num_layers):
        key, kq, ko, k1, k2 = jax.random.split(key, 5)
        w, b = linear_init(kq, d_model, d_model); acc["wq_w"].append(w); acc["wq_b"].append(b)
        w, b = linear_init(ko, d_model, d_model); acc["wo_w"].append(w); acc["wo_b"].append(b)
        w, b = linear_init(k1, d_model, dff);     acc["f1_w"].append(w); acc["f1_b"].append(b)
        w, b = linear_init(k2, dff, d_model);     acc["f2_w"].append(w); acc["f2_b"].append(b)
        acc["ln1_g"].append(jnp.ones((1, d_model), jnp.float32))
        acc["ln1_b"].append(jnp.zeros((1, d_model), jnp.float32))
        acc["ln2_g"].append(jnp.ones((1, d_model), jnp.float32))
        acc["ln2_b"].append(jnp.zeros((1, d_model), jnp.float32))
    return {k: jnp.stack(v) for k, v in acc.items()}


# ---------------------------------------------------------- pure-JAX reference

def reference(params, x, mask, num_heads):
    N, L, D = x.shape
    H = num_heads
    depth = D // H
    num_layers = params["wq_w"].shape[0]

    def layer_norm(v, g, b):
        mu = v.mean(-1, keepdims=True)
        var = ((v - mu) ** 2).mean(-1, keepdims=True)
        return (v - mu) / jnp.sqrt(var + 1e-5) * g + b

    for l in range(num_layers):
        qp = x @ params["wq_w"][l].T + params["wq_b"][l]
        qh = qp.reshape(N, L, H, depth).transpose(0, 2, 1, 3)      # (N,H,L,depth)
        s = jnp.einsum("nhld,nhmd->nhlm", qh, qh) * depth ** -0.5  # k = v = q bug
        if mask is not None:
            s = s + mask * (-1000000000.0)
        p = jax.nn.softmax(s, axis=-1)
        oh = jnp.einsum("nhlm,nhmd->nhld", p, qh)
        merged = oh.transpose(0, 2, 1, 3).reshape(N, L, D)
        attn_out = merged @ params["wo_w"][l].T + params["wo_b"][l]
        y1 = layer_norm(x + attn_out, params["ln1_g"][l], params["ln1_b"][l])
        h = jax.nn.relu(y1 @ params["f1_w"][l].T + params["f1_b"][l])
        ffn = h @ params["f2_w"][l].T + params["f2_b"][l]
        x = layer_norm(y1 + ffn, params["ln2_g"][l], params["ln2_b"][l])
    return x


# --------------------------------------------------------------------- main --

if __name__ == "__main__":
    key = jax.random.PRNGKey(0)
    num_layers, d_model, num_heads, dff = 2, 32, 4, 64
    N, L = 2, 8

    pkey, xkey, mkey = jax.random.split(key, 3)
    params = init_params(pkey, num_layers, d_model, dff)
    x = jax.random.normal(xkey, (N, L, d_model), jnp.float32)
    mask = (jax.random.uniform(mkey, (N, num_heads, L, L)) > 0.8).astype(jnp.float32)

    # masked path
    out = encoder_forward(params, x, mask, num_heads)
    jax.block_until_ready(out)
    ref = reference(params, x, mask, num_heads)
    assert out.shape == (N, L, d_model)
    err = float(jnp.max(jnp.abs(out - ref)))
    # tolerance relaxed slightly for pl.reciprocal(approx=True) in the softmax
    assert err < 5e-3, f"masked-path max abs err {err}"

    # mask=None path (skips the mask DMA entirely)
    out_nm = encoder_forward(params, x, None, num_heads)
    jax.block_until_ready(out_nm)
    ref_nm = reference(params, x, None, num_heads)
    err_nm = float(jnp.max(jnp.abs(out_nm - ref_nm)))
    assert err_nm < 5e-3, f"no-mask-path max abs err {err_nm}"

    print("KERNEL_OK")
</pallas_src>

<mosaic_0001>
module attributes {stable_mosaic.version = 11 : i64} {
  func.func @kernel(%arg0: i32, %arg1: i32, %arg2: memref<1x8x32xf32, #tpu.memory_space<vmem>>, %arg3: memref<1x4x8x8xf32, #tpu.memory_space<vmem>>, %arg4: memref<1x32x32xf32, #tpu.memory_space<vmem>>, %arg5: memref<1x1x32xf32, #tpu.memory_space<vmem>>, %arg6: memref<1x32x32xf32, #tpu.memory_space<vmem>>, %arg7: memref<1x1x32xf32, #tpu.memory_space<vmem>>, %arg8: memref<1x1x32xf32, #tpu.memory_space<vmem>>, %arg9: memref<1x1x32xf32, #tpu.memory_space<vmem>>, %arg10: memref<1x64x32xf32, #tpu.memory_space<vmem>>, %arg11: memref<1x1x64xf32, #tpu.memory_space<vmem>>, %arg12: memref<1x32x64xf32, #tpu.memory_space<vmem>>, %arg13: memref<1x1x32xf32, #tpu.memory_space<vmem>>, %arg14: memref<1x1x32xf32, #tpu.memory_space<vmem>>, %arg15: memref<1x1x32xf32, #tpu.memory_space<vmem>>, %arg16: memref<1x8x32xf32, #tpu.memory_space<vmem>>) attributes {dimension_semantics = [#tpu.dimension_semantics<parallel>, #tpu.dimension_semantics<arbitrary>], iteration_bounds = array<i64: 2, 2>, scalar_prefetch = 0 : i64, scratch_operands = 0 : i64, tpu.core_type = #tpu.core_type<tc>, window_params = [{transform_indices = @transform_0, window_bounds = array<i64: 1, 8, 32>}, {transform_indices = @transform_1, window_bounds = array<i64: 1, 4, 8, 8>}, {transform_indices = @transform_2, window_bounds = array<i64: 1, 32, 32>}, {transform_indices = @transform_3, window_bounds = array<i64: 1, 1, 32>}, {transform_indices = @transform_4, window_bounds = array<i64: 1, 32, 32>}, {transform_indices = @transform_5, window_bounds = array<i64: 1, 1, 32>}, {transform_indices = @transform_6, window_bounds = array<i64: 1, 1, 32>}, {transform_indices = @transform_7, window_bounds = array<i64: 1, 1, 32>}, {transform_indices = @transform_8, window_bounds = array<i64: 1, 64, 32>}, {transform_indices = @transform_9, window_bounds = array<i64: 1, 1, 64>}, {transform_indices = @transform_10, window_bounds = array<i64: 1, 32, 64>}, {transform_indices = @transform_11, window_bounds = array<i64: 1, 1, 32>}, {transform_indices = @transform_12, window_bounds = array<i64: 1, 1, 32>}, {transform_indices = @transform_13, window_bounds = array<i64: 1, 1, 32>}, {transform_indices = @transform_14, window_bounds = array<i64: 1, 8, 32>}]} {
    %c0_i32 = arith.constant 0 : i32
    %0 = arith.cmpi eq, %arg1, %c0_i32 : i32
    %1 = arith.extui %0 : i1 to i32
    %c0_i32_0 = arith.constant 0 : i32
    %2 = arith.cmpi ne, %1, %c0_i32_0 : i32
    scf.if %2 {
      %c0_93 = arith.constant 0 : index
      %c0_94 = arith.constant 0 : index
      %c0_95 = arith.constant 0 : index
      %173 = vector.load %arg2[%c0_93, %c0_94, %c0_95] : memref<1x8x32xf32, #tpu.memory_space<vmem>>, vector<1x8x32xf32>
      %c0_96 = arith.constant 0 : index
      %c0_97 = arith.constant 0 : index
      %c0_98 = arith.constant 0 : index
      %174 = vector.load %arg16[%c0_96, %c0_97, %c0_98] : memref<1x8x32xf32, #tpu.memory_space<vmem>>, vector<1x8x32xf32>
      tpu.vector_store %arg16[%c0_96, %c0_97, %c0_98], %173 {strides = array<i32>} : memref<1x8x32xf32, #tpu.memory_space<vmem>>, vector<1x8x32xf32>,
    } else {
    }
    %c0 = arith.constant 0 : index
    %c0_1 = arith.constant 0 : index
    %c0_2 = arith.constant 0 : index
    %3 = vector.load %arg16[%c0, %c0_1, %c0_2] : memref<1x8x32xf32, #tpu.memory_space<vmem>>, vector<1x8x32xf32>
    %4 = vector.shape_cast %3 : vector<1x8x32xf32> to vector<8x32xf32>
    %c0_3 = arith.constant 0 : index
    %c0_4 = arith.constant 0 : index
    %c0_5 = arith.constant 0 : index
    %5 = vector.load %arg4[%c0_3, %c0_4, %c0_5] : memref<1x32x32xf32, #tpu.memory_space<vmem>>, vector<1x32x32xf32>
    %6 = vector.shape_cast %5 : vector<1x32x32xf32> to vector<32x32xf32>
    %cst = arith.constant dense<0.000000e+00> : vector<8x32xf32>
    %7 = tpu.matmul %4, %6, %cst {dimension_numbers = #tpu.dot_dimension_numbers<[1], [1], [0], [0], [0, 0, 1, 0], [], []>} : vector<8x32xf32>, vector<32x32xf32>, vector<8x32xf32> -> vector<8x32xf32>
    %c0_6 = arith.constant 0 : index
    %c0_7 = arith.constant 0 : index
    %c0_8 = arith.constant 0 : index
    %8 = vector.load %arg5[%c0_6, %c0_7, %c0_8] : memref<1x1x32xf32, #tpu.memory_space<vmem>>, vector<1x1x32xf32>
    %9 = vector.shape_cast %8 : vector<1x1x32xf32> to vector<1x32xf32>
    %10 = vector.broadcast %9 : vector<1x32xf32> to vector<8x32xf32>
    %11 = arith.addf %7, %10 : vector<8x32xf32>
    %12 = vector.extract_strided_slice %11 {offsets = [0, 0], sizes = [8, 8], strides = [1, 1]} : vector<8x32xf32> to vector<8x8xf32>
    %cst_9 = arith.constant dense<0.000000e+00> : vector<8x8xf32>
    %13 = tpu.matmul %12, %12, %cst_9 {dimension_numbers = #tpu.dot_dimension_numbers<[1], [1], [0], [0], [0, 0, 1, 0], [], []>} : vector<8x8xf32>, vector<8x8xf32>, vector<8x8xf32> -> vector<8x8xf32>
    %cst_10 = arith.constant 0.353553385 : f32
    %14 = vector.broadcast %cst_10 : f32 to vector<8x8xf32>
    %15 = arith.mulf %13, %14 : vector<8x8xf32>
    %c0_11 = arith.constant 0 : index
    %c0_12 = arith.constant 0 : index
    %c0_13 = arith.constant 0 : index
    %c0_14 = arith.constant 0 : index
    %16 = vector.load %arg3[%c0_11, %c0_12, %c0_13, %c0_14] : memref<1x4x8x8xf32, #tpu.memory_space<vmem>>, vector<1x1x8x8xf32>
    %17 = vector.shape_cast %16 : vector<1x1x8x8xf32> to vector<8x8xf32>
    %cst_15 = arith.constant -1.000000e+09 : f32
    %18 = vector.broadcast %cst_15 : f32 to vector<8x8xf32>
    %19 = arith.mulf %17, %18 : vector<8x8xf32>
    %20 = arith.addf %15, %19 : vector<8x8xf32>
    %cst_16 = arith.constant dense<0xFF800000> : vector<8xf32>
    %21 = vector.multi_reduction <maximumf>, %20, %cst_16 [1] : vector<8x8xf32> to vector<8xf32>
    %22 = vector.shape_cast %21 : vector<8xf32> to vector<8x1xf32>
    %23 = vector.broadcast %22 : vector<8x1xf32> to vector<8x8xf32>
    %24 = arith.subf %20, %23 : vector<8x8xf32>
    %25 = math.exp %24 : vector<8x8xf32>
    %cst_17 = arith.constant dense<0.000000e+00> : vector<8xf32>
    %26 = vector.multi_reduction <add>, %25, %cst_17 [1] : vector<8x8xf32> to vector<8xf32>
    %27 = vector.shape_cast %26 : vector<8xf32> to vector<8x1xf32>
    %28 = tpu.reciprocal %27 {approx = true} : vector<8x1xf32> -> vector<8x1xf32>
    %29 = vector.broadcast %28 : vector<8x1xf32> to vector<8x8xf32>
    %30 = arith.mulf %25, %29 : vector<8x8xf32>
    %cst_18 = arith.constant dense<0.000000e+00> : vector<8x8xf32>
    %31 = tpu.matmul %30, %12, %cst_18 {dimension_numbers = #tpu.dot_dimension_numbers<[1], [0], [0], [1], [0, 0, 1, 1], [], []>} : vector<8x8xf32>, vector<8x8xf32>, vector<8x8xf32> -> vector<8x8xf32>
    %32 = vector.extract_strided_slice %11 {offsets = [0, 8], sizes = [8, 8], strides = [1, 1]} : vector<8x32xf32> to vector<8x8xf32>
    %cst_19 = arith.constant dense<0.000000e+00> : vector<8x8xf32>
    %33 = tpu.matmul %32, %32, %cst_19 {dimension_numbers = #tpu.dot_dimension_numbers<[1], [1], [0], [0], [0, 0, 1, 0], [], []>} : vector<8x8xf32>, vector<8x8xf32>, vector<8x8xf32> -> vector<8x8xf32>
    %cst_20 = arith.constant 0.353553385 : f32
    %34 = vector.broadcast %cst_20 : f32 to vector<8x8xf32>
    %35 = arith.mulf %33, %34 : vector<8x8xf32>
    %c0_21 = arith.constant 0 : index
    %c1 = arith.constant 1 : index
    %c0_22 = arith.constant 0 : index
    %c0_23 = arith.constant 0 : index
    %36 = vector.load %arg3[%c0_21, %c1, %c0_22, %c0_23] : memref<1x4x8x8xf32, #tpu.memory_space<vmem>>, vector<1x1x8x8xf32>
    %37 = vector.shape_cast %36 : vector<1x1x8x8xf32> to vector<8x8xf32>
    %cst_24 = arith.constant -1.000000e+09 : f32
    %38 = vector.broadcast %cst_24 : f32 to vector<8x8xf32>
    %39 = arith.mulf %37, %38 : vector<8x8xf32>
    %40 = arith.addf %35, %39 : vector<8x8xf32>
    %cst_25 = arith.constant dense<0xFF800000> : vector<8xf32>
    %41 = vector.multi_reduction <maximumf>, %40, %cst_25 [1] : vector<8x8xf32> to vector<8xf32>
    %42 = vector.shape_cast %41 : vector<8xf32> to vector<8x1xf32>
    %43 = vector.broadcast %42 : vector<8x1xf32> to vector<8x8xf32>
    %44 = arith.subf %40, %43 : vector<8x8xf32>
    %45 = math.exp %44 : vector<8x8xf32>
    %cst_26 = arith.constant dense<0.000000e+00> : vector<8xf32>
    %46 = vector.multi_reduction <add>, %45, %cst_26 [1] : vector<8x8xf32> to vector<8xf32>
    %47 = vector.shape_cast %46 : vector<8xf32> to vector<8x1xf32>
    %48 = tpu.reciprocal %47 {approx = true} : vector<8x1xf32> -> vector<8x1xf32>
    %49 = vector.broadcast %48 : vector<8x1xf32> to vector<8x8xf32>
    %50 = arith.mulf %45, %49 : vector<8x8xf32>
    %cst_27 = arith.constant dense<0.000000e+00> : vector<8x8xf32>
    %51 = tpu.matmul %50, %32, %cst_27 {dimension_numbers = #tpu.dot_dimension_numbers<[1], [0], [0], [1], [0, 0, 1, 1], [], []>} : vector<8x8xf32>, vector<8x8xf32>, vector<8x8xf32> -> vector<8x8xf32>
    %52 = vector.extract_strided_slice %11 {offsets = [0, 16], sizes = [8, 8], strides = [1, 1]} : vector<8x32xf32> to vector<8x8xf32>
    %cst_28 = arith.constant dense<0.000000e+00> : vector<8x8xf32>
    %53 = tpu.matmul %52, %52, %cst_28 {dimension_numbers = #tpu.dot_dimension_numbers<[1], [1], [0], [0], [0, 0, 1, 0], [], []>} : vector<8x8xf32>, vector<8x8xf32>, vector<8x8xf32> -> vector<8x8xf32>
    %cst_29 = arith.constant 0.353553385 : f32
    %54 = vector.broadcast %cst_29 : f32 to vector<8x8xf32>
    %55 = arith.mulf %53, %54 : vector<8x8xf32>
    %c0_30 = arith.constant 0 : index
    %c2 = arith.constant 2 : index
    %c0_31 = arith.constant 0 : index
    %c0_32 = arith.constant 0 : index
    %56 = vector.load %arg3[%c0_30, %c2, %c0_31, %c0_32] : memref<1x4x8x8xf32, #tpu.memory_space<vmem>>, vector<1x1x8x8xf32>
    %57 = vector.shape_cast %56 : vector<1x1x8x8xf32> to vector<8x8xf32>
    %cst_33 = arith.constant -1.000000e+09 : f32
    %58 = vector.broadcast %cst_33 : f32 to vector<8x8xf32>
    %59 = arith.mulf %57, %58 : vector<8x8xf32>
    %60 = arith.addf %55, %59 : vector<8x8xf32>
    %cst_34 = arith.constant dense<0xFF800000> : vector<8xf32>
    %61 = vector.multi_reduction <maximumf>, %60, %cst_34 [1] : vector<8x8xf32> to vector<8xf32>
    %62 = vector.shape_cast %61 : vector<8xf32> to vector<8x1xf32>
    %63 = vector.broadcast %62 : vector<8x1xf32> to vector<8x8xf32>
    %64 = arith.subf %60, %63 : vector<8x8xf32>
    %65 = math.exp %64 : vector<8x8xf32>
    %cst_35 = arith.constant dense<0.000000e+00> : vector<8xf32>
    %66 = vector.multi_reduction <add>, %65, %cst_35 [1] : vector<8x8xf32> to vector<8xf32>
    %67 = vector.shape_cast %66 : vector<8xf32> to vector<8x1xf32>
    %68 = tpu.reciprocal %67 {approx = true} : vector<8x1xf32> -> vector<8x1xf32>
    %69 = vector.broadcast %68 : vector<8x1xf32> to vector<8x8xf32>
    %70 = arith.mulf %65, %69 : vector<8x8xf32>
    %cst_36 = arith.constant dense<0.000000e+00> : vector<8x8xf32>
    %71 = tpu.matmul %70, %52, %cst_36 {dimension_numbers = #tpu.dot_dimension_numbers<[1], [0], [0], [1], [0, 0, 1, 1], [], []>} : vector<8x8xf32>, vector<8x8xf32>, vector<8x8xf32> -> vector<8x8xf32>
    %72 = vector.extract_strided_slice %11 {offsets = [0, 24], sizes = [8, 8], strides = [1, 1]} : vector<8x32xf32> to vector<8x8xf32>
    %cst_37 = arith.constant dense<0.000000e+00> : vector<8x8xf32>
    %73 = tpu.matmul %72, %72, %cst_37 {dimension_numbers = #tpu.dot_dimension_numbers<[1], [1], [0], [0], [0, 0, 1, 0], [], []>} : vector<8x8xf32>, vector<8x8xf32>, vector<8x8xf32> -> vector<8x8xf32>
    %cst_38 = arith.constant 0.353553385 : f32
    %74 = vector.broadcast %cst_38 : f32 to vector<8x8xf32>
    %75 = arith.mulf %73, %74 : vector<8x8xf32>
    %c0_39 = arith.constant 0 : index
    %c3 = arith.constant 3 : index
    %c0_40 = arith.constant 0 : index
    %c0_41 = arith.constant 0 : index
    %76 = vector.load %arg3[%c0_39, %c3, %c0_40, %c0_41] : memref<1x4x8x8xf32, #tpu.memory_space<vmem>>, vector<1x1x8x8xf32>
    %77 = vector.shape_cast %76 : vector<1x1x8x8xf32> to vector<8x8xf32>
    %cst_42 = arith.constant -1.000000e+09 : f32
    %78 = vector.broadcast %cst_42 : f32 to vector<8x8xf32>
    %79 = arith.mulf %77, %78 : vector<8x8xf32>
    %80 = arith.addf %75, %79 : vector<8x8xf32>
    %cst_43 = arith.constant dense<0xFF800000> : vector<8xf32>
    %81 = vector.multi_reduction <maximumf>, %80, %cst_43 [1] : vector<8x8xf32> to vector<8xf32>
    %82 = vector.shape_cast %81 : vector<8xf32> to vector<8x1xf32>
    %83 = vector.broadcast %82 : vector<8x1xf32> to vector<8x8xf32>
    %84 = arith.subf %80, %83 : vector<8x8xf32>
    %85 = math.exp %84 : vector<8x8xf32>
    %cst_44 = arith.constant dense<0.000000e+00> : vector<8xf32>
    %86 = vector.multi_reduction <add>, %85, %cst_44 [1] : vector<8x8xf32> to vector<8xf32>
    %87 = vector.shape_cast %86 : vector<8xf32> to vector<8x1xf32>
    %88 = tpu.reciprocal %87 {approx = true} : vector<8x1xf32> -> vector<8x1xf32>
    %89 = vector.broadcast %88 : vector<8x1xf32> to vector<8x8xf32>
    %90 = arith.mulf %85, %89 : vector<8x8xf32>
    %cst_45 = arith.constant dense<0.000000e+00> : vector<8x8xf32>
    %91 = tpu.matmul %90, %72, %cst_45 {dimension_numbers = #tpu.dot_dimension_numbers<[1], [0], [0], [1], [0, 0, 1, 1], [], []>} : vector<8x8xf32>, vector<8x8xf32>, vector<8x8xf32> -> vector<8x8xf32>
    %92 = tpu.concatenate %31, %51, %71, %91 in 1 : vector<8x8xf32>, vector<8x8xf32>, vector<8x8xf32>, vector<8x8xf32> -> vector<8x32xf32>
    %c0_46 = arith.constant 0 : index
    %c0_47 = arith.constant 0 : index
    %c0_48 = arith.constant 0 : index
    %93 = vector.load %arg6[%c0_46, %c0_47, %c0_48] : memref<1x32x32xf32, #tpu.memory_space<vmem>>, vector<1x32x32xf32>
    %94 = vector.shape_cast %93 : vector<1x32x32xf32> to vector<32x32xf32>
    %cst_49 = arith.constant dense<0.000000e+00> : vector<8x32xf32>
    %95 = tpu.matmul %92, %94, %cst_49 {dimension_numbers = #tpu.dot_dimension_numbers<[1], [1], [0], [0], [0, 0, 1, 0], [], []>} : vector<8x32xf32>, vector<32x32xf32>, vector<8x32xf32> -> vector<8x32xf32>
    %c0_50 = arith.constant 0 : index
    %c0_51 = arith.constant 0 : index
    %c0_52 = arith.constant 0 : index
    %96 = vector.load %arg7[%c0_50, %c0_51, %c0_52] : memref<1x1x32xf32, #tpu.memory_space<vmem>>, vector<1x1x32xf32>
    %97 = vector.shape_cast %96 : vector<1x1x32xf32> to vector<1x32xf32>
    %98 = vector.broadcast %97 : vector<1x32xf32> to vector<8x32xf32>
    %99 = arith.addf %95, %98 : vector<8x32xf32>
    %100 = arith.addf %4, %99 : vector<8x32xf32>
    %cst_53 = arith.constant dense<0.000000e+00> : vector<8xf32>
    %101 = vector.multi_reduction <add>, %100, %cst_53 [1] : vector<8x32xf32> to vector<8xf32>
    %102 = vector.shape_cast %101 : vector<8xf32> to vector<8x1xf32>
    %cst_54 = arith.constant 3.200000e+01 : f32
    %103 = vector.broadcast %cst_54 : f32 to vector<8x1xf32>
    %104 = arith.divf %102, %103 : vector<8x1xf32>
    %105 = vector.broadcast %104 : vector<8x1xf32> to vector<8x32xf32>
    %106 = arith.subf %100, %105 : vector<8x32xf32>
    %107 = arith.mulf %106, %106 : vector<8x32xf32>
    %cst_55 = arith.constant dense<0.000000e+00> : vector<8xf32>
    %108 = vector.multi_reduction <add>, %107, %cst_55 [1] : vector<8x32xf32> to vector<8xf32>
    %109 = vector.shape_cast %108 : vector<8xf32> to vector<8x1xf32>
    %cst_56 = arith.constant 3.200000e+01 : f32
    %110 = vector.broadcast %cst_56 : f32 to vector<8x1xf32>
    %111 = arith.divf %109, %110 : vector<8x1xf32>
    %112 = vector.broadcast %104 : vector<8x1xf32> to vector<8x32xf32>
    %113 = arith.subf %100, %112 : vector<8x32xf32>
    %cst_57 = arith.constant 9.99999974E-6 : f32
    %114 = vector.broadcast %cst_57 : f32 to vector<8x1xf32>
    %115 = arith.addf %111, %114 : vector<8x1xf32>
    %116 = math.rsqrt %115 : vector<8x1xf32>
    %117 = vector.broadcast %116 : vector<8x1xf32> to vector<8x32xf32>
    %118 = arith.mulf %113, %117 : vector<8x32xf32>
    %c0_58 = arith.constant 0 : index
    %c0_59 = arith.constant 0 : index
    %c0_60 = arith.constant 0 : index
    %119 = vector.load %arg8[%c0_58, %c0_59, %c0_60] : memref<1x1x32xf32, #tpu.memory_space<vmem>>, vector<1x1x32xf32>
    %120 = vector.shape_cast %119 : vector<1x1x32xf32> to vector<1x32xf32>
    %121 = vector.broadcast %120 : vector<1x32xf32> to vector<8x32xf32>
    %122 = arith.mulf %118, %121 : vector<8x32xf32>
    %c0_61 = arith.constant 0 : index
    %c0_62 = arith.constant 0 : index
    %c0_63 = arith.constant 0 : index
    %123 = vector.load %arg9[%c0_61, %c0_62, %c0_63] : memref<1x1x32xf32, #tpu.memory_space<vmem>>, vector<1x1x32xf32>
    %124 = vector.shape_cast %123 : vector<1x1x32xf32> to vector<1x32xf32>
    %125 = vector.broadcast %124 : vector<1x32xf32> to vector<8x32xf32>
    %126 = arith.addf %122, %125 : vector<8x32xf32>
    %c0_64 = arith.constant 0 : index
    %c0_65 = arith.constant 0 : index
    %c0_66 = arith.constant 0 : index
    %127 = vector.load %arg10[%c0_64, %c0_65, %c0_66] : memref<1x64x32xf32, #tpu.memory_space<vmem>>, vector<1x64x32xf32>
    %128 = vector.shape_cast %127 : vector<1x64x32xf32> to vector<64x32xf32>
    %cst_67 = arith.constant dense<0.000000e+00> : vector<8x64xf32>
    %129 = tpu.matmul %126, %128, %cst_67 {dimension_numbers = #tpu.dot_dimension_numbers<[1], [1], [0], [0], [0, 0, 1, 0], [], []>} : vector<8x32xf32>, vector<64x32xf32>, vector<8x64xf32> -> vector<8x64xf32>
    %c0_68 = arith.constant 0 : index
    %c0_69 = arith.constant 0 : index
    %c0_70 = arith.constant 0 : index
    %130 = vector.load %arg11[%c0_68, %c0_69, %c0_70] : memref<1x1x64xf32, #tpu.memory_space<vmem>>, vector<1x1x64xf32>
    %131 = vector.shape_cast %130 : vector<1x1x64xf32> to vector<1x64xf32>
    %132 = vector.broadcast %131 : vector<1x64xf32> to vector<8x64xf32>
    %133 = arith.addf %129, %132 : vector<8x64xf32>
    %cst_71 = arith.constant 0.000000e+00 : f32
    %134 = vector.broadcast %cst_71 : f32 to vector<8x64xf32>
    %135 = arith.maximumf %133, %134 : vector<8x64xf32>
    %c0_72 = arith.constant 0 : index
    %c0_73 = arith.constant 0 : index
    %c0_74 = arith.constant 0 : index
    %136 = vector.load %arg12[%c0_72, %c0_73, %c0_74] : memref<1x32x64xf32, #tpu.memory_space<vmem>>, vector<1x32x64xf32>
    %137 = vector.shape_cast %136 : vector<1x32x64xf32> to vector<32x64xf32>
    %cst_75 = arith.constant dense<0.000000e+00> : vector<8x32xf32>
    %138 = tpu.matmul %135, %137, %cst_75 {dimension_numbers = #tpu.dot_dimension_numbers<[1], [1], [0], [0], [0, 0, 1, 0], [], []>} : vector<8x64xf32>, vector<32x64xf32>, vector<8x32xf32> -> vector<8x32xf32>
    %c0_76 = arith.constant 0 : index
    %c0_77 = arith.constant 0 : index
    %c0_78 = arith.constant 0 : index
    %139 = vector.load %arg13[%c0_76, %c0_77, %c0_78] : memref<1x1x32xf32, #tpu.memory_space<vmem>>, vector<1x1x32xf32>
    %140 = vector.shape_cast %139 : vector<1x1x32xf32> to vector<1x32xf32>
    %141 = vector.broadcast %140 : vector<1x32xf32> to vector<8x32xf32>
    %142 = arith.addf %138, %141 : vector<8x32xf32>
    %143 = arith.addf %126, %142 : vector<8x32xf32>
    %cst_79 = arith.constant dense<0.000000e+00> : vector<8xf32>
    %144 = vector.multi_reduction <add>, %143, %cst_79 [1] : vector<8x32xf32> to vector<8xf32>
    %145 = vector.shape_cast %144 : vector<8xf32> to vector<8x1xf32>
    %cst_80 = arith.constant 3.200000e+01 : f32
    %146 = vector.broadcast %cst_80 : f32 to vector<8x1xf32>
    %147 = arith.divf %145, %146 : vector<8x1xf32>
    %148 = vector.broadcast %147 : vector<8x1xf32> to vector<8x32xf32>
    %149 = arith.subf %143, %148 : vector<8x32xf32>
    %150 = arith.mulf %149, %149 : vector<8x32xf32>
    %cst_81 = arith.constant dense<0.000000e+00> : vector<8xf32>
    %151 = vector.multi_reduction <add>, %150, %cst_81 [1] : vector<8x32xf32> to vector<8xf32>
    %152 = vector.shape_cast %151 : vector<8xf32> to vector<8x1xf32>
    %cst_82 = arith.constant 3.200000e+01 : f32
    %153 = vector.broadcast %cst_82 : f32 to vector<8x1xf32>
    %154 = arith.divf %152, %153 : vector<8x1xf32>
    %155 = vector.broadcast %147 : vector<8x1xf32> to vector<8x32xf32>
    %156 = arith.subf %143, %155 : vector<8x32xf32>
    %cst_83 = arith.constant 9.99999974E-6 : f32
    %157 = vector.broadcast %cst_83 : f32 to vector<8x1xf32>
    %158 = arith.addf %154, %157 : vector<8x1xf32>
    %159 = math.rsqrt %158 : vector<8x1xf32>
    %160 = vector.broadcast %159 : vector<8x1xf32> to vector<8x32xf32>
    %161 = arith.mulf %156, %160 : vector<8x32xf32>
    %c0_84 = arith.constant 0 : index
    %c0_85 = arith.constant 0 : index
    %c0_86 = arith.constant 0 : index
    %162 = vector.load %arg14[%c0_84, %c0_85, %c0_86] : memref<1x1x32xf32, #tpu.memory_space<vmem>>, vector<1x1x32xf32>
    %163 = vector.shape_cast %162 : vector<1x1x32xf32> to vector<1x32xf32>
    %164 = vector.broadcast %163 : vector<1x32xf32> to vector<8x32xf32>
    %165 = arith.mulf %161, %164 : vector<8x32xf32>
    %c0_87 = arith.constant 0 : index
    %c0_88 = arith.constant 0 : index
    %c0_89 = arith.constant 0 : index
    %166 = vector.load %arg15[%c0_87, %c0_88, %c0_89] : memref<1x1x32xf32, #tpu.memory_space<vmem>>, vector<1x1x32xf32>
    %167 = vector.shape_cast %166 : vector<1x1x32xf32> to vector<1x32xf32>
    %168 = vector.broadcast %167 : vector<1x32xf32> to vector<8x32xf32>
    %169 = arith.addf %165, %168 : vector<8x32xf32>
    %c0_90 = arith.constant 0 : index
    %c0_91 = arith.constant 0 : index
    %c0_92 = arith.constant 0 : index
    %170 = vector.load %arg16[%c0_90, %c0_91, %c0_92] : memref<1x8x32xf32, #tpu.memory_space<vmem>>, vector<1x8x32xf32>
    %171 = vector.shape_cast %170 : vector<1x8x32xf32> to vector<8x32xf32>
    %172 = vector.shape_cast %169 : vector<8x32xf32> to vector<1x8x32xf32>
    tpu.vector_store %arg16[%c0_90, %c0_91, %c0_92], %172 {strides = array<i32>} : memref<1x8x32xf32, #tpu.memory_space<vmem>>, vector<1x8x32xf32>,
    return
  }
  func.func @transform_0(%arg0: i32, %arg1: i32) -> (i32, i32, i32) {
    %c0_i32 = arith.constant 0 : i32
    %c0_i32_0 = arith.constant 0 : i32
    %c0_i32_1 = arith.constant 0 : i32
    return %arg0, %c0_i32, %c0_i32_0 : i32, i32, i32
  }
  func.func @transform_1(%arg0: i32, %arg1: i32) -> (i32, i32, i32, i32) {
    %c0_i32 = arith.constant 0 : i32
    %c0_i32_0 = arith.constant 0 : i32
    %c0_i32_1 = arith.constant 0 : i32
    %c0_i32_2 = arith.constant 0 : i32
    return %arg0, %c0_i32, %c0_i32_0, %c0_i32_1 : i32, i32, i32, i32
  }
  func.func @transform_2(%arg0: i32, %arg1: i32) -> (i32, i32, i32) {
    %c0_i32 = arith.constant 0 : i32
    %c0_i32_0 = arith.constant 0 : i32
    %c0_i32_1 = arith.constant 0 : i32
    return %arg1, %c0_i32, %c0_i32_0 : i32, i32, i32
  }
  func.func @transform_3(%arg0: i32, %arg1: i32) -> (i32, i32, i32) {
    %c0_i32 = arith.constant 0 : i32
    %c0_i32_0 = arith.constant 0 : i32
    %c0_i32_1 = arith.constant 0 : i32
    return %arg1, %c0_i32, %c0_i32_0 : i32, i32, i32
  }
  func.func @transform_4(%arg0: i32, %arg1: i32) -> (i32, i32, i32) {
    %c0_i32 = arith.constant 0 : i32
    %c0_i32_0 = arith.constant 0 : i32
    %c0_i32_1 = arith.constant 0 : i32
    return %arg1, %c0_i32, %c0_i32_0 : i32, i32, i32
  }
  func.func @transform_5(%arg0: i32, %arg1: i32) -> (i32, i32, i32) {
    %c0_i32 = arith.constant 0 : i32
    %c0_i32_0 = arith.constant 0 : i32
    %c0_i32_1 = arith.constant 0 : i32
    return %arg1, %c0_i32, %c0_i32_0 : i32, i32, i32
  }
  func.func @transform_6(%arg0: i32, %arg1: i32) -> (i32, i32, i32) {
    %c0_i32 = arith.constant 0 : i32
    %c0_i32_0 = arith.constant 0 : i32
    %c0_i32_1 = arith.constant 0 : i32
    return %arg1, %c0_i32, %c0_i32_0 : i32, i32, i32
  }
  func.func @transform_7(%arg0: i32, %arg1: i32) -> (i32, i32, i32) {
    %c0_i32 = arith.constant 0 : i32
    %c0_i32_0 = arith.constant 0 : i32
    %c0_i32_1 = arith.constant 0 : i32
    return %arg1, %c0_i32, %c0_i32_0 : i32, i32, i32
  }
  func.func @transform_8(%arg0: i32, %arg1: i32) -> (i32, i32, i32) {
    %c0_i32 = arith.constant 0 : i32
    %c0_i32_0 = arith.constant 0 : i32
    %c0_i32_1 = arith.constant 0 : i32
    return %arg1, %c0_i32, %c0_i32_0 : i32, i32, i32
  }
  func.func @transform_9(%arg0: i32, %arg1: i32) -> (i32, i32, i32) {
    %c0_i32 = arith.constant 0 : i32
    %c0_i32_0 = arith.constant 0 : i32
    %c0_i32_1 = arith.constant 0 : i32
    return %arg1, %c0_i32, %c0_i32_0 : i32, i32, i32
  }
  func.func @transform_10(%arg0: i32, %arg1: i32) -> (i32, i32, i32) {
    %c0_i32 = arith.constant 0 : i32
    %c0_i32_0 = arith.constant 0 : i32
    %c0_i32_1 = arith.constant 0 : i32
    return %arg1, %c0_i32, %c0_i32_0 : i32, i32, i32
  }
  func.func @transform_11(%arg0: i32, %arg1: i32) -> (i32, i32, i32) {
    %c0_i32 = arith.constant 0 : i32
    %c0_i32_0 = arith.constant 0 : i32
    %c0_i32_1 = arith.constant 0 : i32
    return %arg1, %c0_i32, %c0_i32_0 : i32, i32, i32
  }
  func.func @transform_12(%arg0: i32, %arg1: i32) -> (i32, i32, i32) {
    %c0_i32 = arith.constant 0 : i32
    %c0_i32_0 = arith.constant 0 : i32
    %c0_i32_1 = arith.constant 0 : i32
    return %arg1, %c0_i32, %c0_i32_0 : i32, i32, i32
  }
  func.func @transform_13(%arg0: i32, %arg1: i32) -> (i32, i32, i32) {
    %c0_i32 = arith.constant 0 : i32
    %c0_i32_0 = arith.constant 0 : i32
    %c0_i32_1 = arith.constant 0 : i32
    return %arg1, %c0_i32, %c0_i32_0 : i32, i32, i32
  }
  func.func @transform_14(%arg0: i32, %arg1: i32) -> (i32, i32, i32) {
    %c0_i32 = arith.constant 0 : i32
    %c0_i32_0 = arith.constant 0 : i32
    %c0_i32_1 = arith.constant 0 : i32
    return %arg0, %c0_i32, %c0_i32_0 : i32, i32, i32
  }
}

</mosaic_0001>

<llo_original>
// kernel: tpu_custom_call.1
$region0: #{tpu_custom_call.1}
  #allocation0 [shape = 'u32[]', space=smem, size = 0x4, offset = 0x4, fixed_abs, tag = 'smem constant byte address 0x4 - core index']
  #allocation1 [shape = 'u32[144,128]{1,0:T(1,128)}', space=vmem, size = 0x12000, scoped, tag = 'internal scratch']
  %s0 = inlined_call_operand.hbm [shape: f32[2,8,32], index: 0, kind: input, shape index: {}]
  %s1 = inlined_call_operand.vmem [shape: f32[2,4,8,8], index: 1, kind: input, shape index: {}]
  %s2 = inlined_call_operand.vmem [shape: f32[2,32,32], index: 2, kind: input, shape index: {}]
  %s3 = inlined_call_operand.vmem [shape: f32[2,1,32], index: 3, kind: input, shape index: {}]
  %s4 = inlined_call_operand.vmem [shape: f32[2,32,32], index: 4, kind: input, shape index: {}]
  %s5 = inlined_call_operand.vmem [shape: f32[2,1,32], index: 5, kind: input, shape index: {}]
  %s6 = inlined_call_operand.vmem [shape: f32[2,1,32], index: 6, kind: input, shape index: {}]
  %s7 = inlined_call_operand.vmem [shape: f32[2,1,32], index: 7, kind: input, shape index: {}]
  %s8 = inlined_call_operand.vmem [shape: f32[2,64,32], index: 8, kind: input, shape index: {}]
  %s9 = inlined_call_operand.vmem [shape: f32[2,1,64], index: 9, kind: input, shape index: {}]
  %s10 = inlined_call_operand.hbm [shape: f32[2,32,64], index: 10, kind: input, shape index: {}]
  %s11 = inlined_call_operand.vmem [shape: f32[2,1,32], index: 11, kind: input, shape index: {}]
  %s12 = inlined_call_operand.vmem [shape: f32[2,1,32], index: 12, kind: input, shape index: {}]
  %s13 = inlined_call_operand.vmem [shape: f32[2,1,32], index: 13, kind: input, shape index: {}]
  %s14 = inlined_call_operand.hbm [shape: f32[2,8,32], index: 14, kind: output, shape index: {}]
  %s15 = sld [smem:[#allocation0]]
  $region101: #{tpu_custom_call.1} parent=0
    _
  %s17 = ssub.s32 1, %s15
  %s18 = scalar_select 0, %s17, %s15
  $region1: #{tpu_custom_call.1} parent=0
    #allocation2 [shape = 'u8[8192]{0}', space=vmem, size = 0x2000, scoped, tag = 'input window, operand 0']
    #allocation3 [shape = 's32[2]{0}', space=sflag, size = 0x8, scoped, tag = 'scoped memory for tpu_custom_call.1']
    #allocation4 [shape = 's32[2]{0}', space=sflag, size = 0x8, scoped, tag = 'scoped memory for tpu_custom_call.1']
    #allocation5 [shape = 'u8[32768]{0}', space=vmem, size = 0x8000, scoped, tag = 'input window, operand 10']
    #allocation6 [shape = 's32[2]{0}', space=sflag, size = 0x8, scoped, tag = 'scoped memory for tpu_custom_call.1']
    #allocation7 [shape = 'u8[8192]{0}', space=vmem, size = 0x2000, scoped, tag = 'output window, operand 0']
    %19 = vsyncpa [#allocation3], 0
    %s20 = scalar_lea.sflag [#allocation3], 1
    %21 = vsyncpa %s20, 0
    %22 = vsyncpa [#allocation6], 0
    %s23 = scalar_lea.sflag [#allocation6], 1
    %24 = vsyncpa %s23, 0
    %25 = vsyncpa [#allocation4], 0
    %s26 = scalar_lea.sflag [#allocation4], 1
    %27 = vsyncpa %s26, 0
    loop: start=0, step=1, limit=6
    $region2: #{tpu_custom_call.1} parent=1 // loop_pre_header
      _
    $region3: #{tpu_custom_call.1} parent=1 // loop_header
      %s29 = sphi 0, %s33
      %p30 = scmp.ge.s32.totalorder %s29, 6
      %s36 = sphi 0, %s48
      %s37 = sphi 0, %s44
      %s38 = sphi 0, %s36
      %s39 = sphi 0, %s37
      %s40 = sphi 0, %s38
      %s41 = sphi 0, %s39
      %s51 = sphi 0, %s53
      %s54 = sphi 0, %s51
      %s55 = sphi 0, %s54
      %s71 = sphi 0, %s55
      %s77 = sphi 0, %s79
      %s80 = sphi 0, %s77
      %s81 = sphi 0, %s80
      %s97 = sphi 0, %s81
      %s103 = sphi 0, %s105
      %s106 = sphi 0, %s103
      %s107 = sphi 0, %s106
      %s123 = sphi 0, %s107
      %s129 = sphi 0, %s131
      %s132 = sphi 0, %s129
      %s133 = sphi 0, %s132
      %s149 = sphi 0, %s133
      %s155 = sphi 0, %s157
      %s158 = sphi 0, %s155
      %s159 = sphi 0, %s158
      %s175 = sphi 0, %s159
      %s181 = sphi 0, %s183
      %s184 = sphi 0, %s181
      %s185 = sphi 0, %s184
      %s201 = sphi 0, %s185
      %s207 = sphi 0, %s209
      %s210 = sphi 0, %s207
      %s211 = sphi 0, %s210
      %s227 = sphi 0, %s211
      %s233 = sphi 0, %s235
      %s236 = sphi 0, %s233
      %s237 = sphi 0, %s236
      %s253 = sphi 0, %s237
      %s259 = sphi 0, %s261
      %s262 = sphi 0, %s259
      %s263 = sphi 0, %s262
      %s279 = sphi 0, %s263
      %s285 = sphi 0, %s287
      %s288 = sphi 0, %s285
      %s289 = sphi 0, %s288
      %s305 = sphi 0, %s289
      %s311 = sphi 0, %s313
      %s314 = sphi 0, %s311
      %s315 = sphi 0, %s314
      %s331 = sphi 0, %s315
      %s337 = sphi 0, %s339
      %s340 = sphi 0, %s337
      %s341 = sphi 0, %s340
      %s357 = sphi 0, %s341
      %s363 = sphi 0, %s365
      %s366 = sphi 0, %s363
      %s367 = sphi 0, %s366
      %s383 = sphi 0, %s367
      %s389 = sphi 0, %s391
      %s392 = sphi 0, %s389
      %s393 = sphi 0, %s392
      %s409 = sphi 0, %s393
      %s415 = sphi 0, %s417
      %s418 = sphi 0, %s415
      %s419 = sphi 0, %s418
      %s435 = sphi 0, %s419
    $region4: #{tpu_custom_call.1} parent=1 // loop_header_branch
      %32 = sbr.rel (%p30) target = $region8
    $region5: #{tpu_custom_call.1} parent=1 // loop_body
      %s34 = ssub.s32 %s29, 1
      %s35 = ssub.s32 %s29, 2
      %s42 = sadd.s32 1, %s37
      %p43 = scmp.ge.s32.totalorder %s42, 2
      %s44 = scalar_select %p43, 0, %s42
      %s45 = sadd.s32 1, %s36
      %s46 = scalar_select %p43, %s45, %s36
      %p47 = scmp.ge.s32.totalorder %s46, 2
      %s48 = scalar_select %p47, 0, %s46
      %s49 = ssub.s32 %s36, %s48
      %p50 = scmp.eq.s32.totalorder %s49, 0
      %s52 = sadd.s32 %s51, 1
      %s53 = scalar_select %p50, %s51, %s52
      %p56 = pneg %p50
      %p57 = scmp.eq.s32.totalorder %s29, 3
      %p58 = por %p56, %p57
      %p59 = scmp.ne.s32.totalorder %s51, %s54
      %p60 = scmp.eq.s32.totalorder %s29, 0
      %p61 = por %p59, %p60
      %p62 = scmp.ne.s32.totalorder %s51, %s54
      %p63 = scmp.eq.s32.totalorder %s34, 3
      %p64 = por %p62, %p63
      %p65 = scmp.ne.s32.totalorder %s54, %s55
      %p66 = scmp.eq.s32.totalorder %s34, 0
      %p67 = por %p65, %p66
      %p68 = scmp.ne.s32.totalorder %s54, %s55
      %p69 = scmp.eq.s32.totalorder %s35, 3
      %p70 = por %p68, %p69
      %p72 = scmp.ne.s32.totalorder %s55, %s71
      %p73 = scmp.eq.s32.totalorder %s35, 0
      %p74 = por %p72, %p73
      %s75 = ssub.s32 %s36, %s48
      %p76 = scmp.eq.s32.totalorder %s75, 0
      %s78 = sadd.s32 %s77, 1
      %s79 = scalar_select %p76, %s77, %s78
      %p82 = pneg %p76
      %p83 = scmp.eq.s32.totalorder %s29, 3
      %p84 = por %p82, %p83
      %p85 = scmp.ne.s32.totalorder %s77, %s80
      %p86 = scmp.eq.s32.totalorder %s29, 0
      %p87 = por %p85, %p86
      %p88 = scmp.ne.s32.totalorder %s77, %s80
      %p89 = scmp.eq.s32.totalorder %s34, 3
      %p90 = por %p88, %p89
      %p91 = scmp.ne.s32.totalorder %s80, %s81
      %p92 = scmp.eq.s32.totalorder %s34, 0
      %p93 = por %p91, %p92
      %p94 = scmp.ne.s32.totalorder %s80, %s81
      %p95 = scmp.eq.s32.totalorder %s35, 3
      %p96 = por %p94, %p95
      %p98 = scmp.ne.s32.totalorder %s81, %s97
      %p99 = scmp.eq.s32.totalorder %s35, 0
      %p100 = por %p98, %p99
      %s101 = ssub.s32 %s37, %s44
      %p102 = scmp.eq.s32.totalorder %s101, 0
      %s104 = sadd.s32 %s103, 1
      %s105 = scalar_select %p102, %s103, %s104
      %p108 = pneg %p102
      %p109 = scmp.eq.s32.totalorder %s29, 3
      %p110 = por %p108, %p109
      %p111 = scmp.ne.s32.totalorder %s103, %s106
      %p112 = scmp.eq.s32.totalorder %s29, 0
      %p113 = por %p111, %p112
      %p114 = scmp.ne.s32.totalorder %s103, %s106
      %p115 = scmp.eq.s32.totalorder %s34, 3
      %p116 = por %p114, %p115
      %p117 = scmp.ne.s32.totalorder %s106, %s107
      %p118 = scmp.eq.s32.totalorder %s34, 0
      %p119 = por %p117, %p118
      %p120 = scmp.ne.s32.totalorder %s106, %s107
      %p121 = scmp.eq.s32.totalorder %s35, 3
      %p122 = por %p120, %p121
      %p124 = scmp.ne.s32.totalorder %s107, %s123
      %p125 = scmp.eq.s32.totalorder %s35, 0
      %p126 = por %p124, %p125
      %s127 = ssub.s32 %s37, %s44
      %p128 = scmp.eq.s32.totalorder %s127, 0
      %s130 = sadd.s32 %s129, 1
      %s131 = scalar_select %p128, %s129, %s130
      %p134 = pneg %p128
      %p135 = scmp.eq.s32.totalorder %s29, 3
      %p136 = por %p134, %p135
      %p137 = scmp.ne.s32.totalorder %s129, %s132
      %p138 = scmp.eq.s32.totalorder %s29, 0
      %p139 = por %p137, %p138
      %p140 = scmp.ne.s32.totalorder %s129, %s132
      %p141 = scmp.eq.s32.totalorder %s34, 3
      %p142 = por %p140, %p141
      %p143 = scmp.ne.s32.totalorder %s132, %s133
      %p144 = scmp.eq.s32.totalorder %s34, 0
      %p145 = por %p143, %p144
      %p146 = scmp.ne.s32.totalorder %s132, %s133
      %p147 = scmp.eq.s32.totalorder %s35, 3
      %p148 = por %p146, %p147
      %p150 = scmp.ne.s32.totalorder %s133, %s149
      %p151 = scmp.eq.s32.totalorder %s35, 0
      %p152 = por %p150, %p151
      %s153 = ssub.s32 %s37, %s44
      %p154 = scmp.eq.s32.totalorder %s153, 0
      %s156 = sadd.s32 %s155, 1
      %s157 = scalar_select %p154, %s155, %s156
      %p160 = pneg %p154
      %p161 = scmp.eq.s32.totalorder %s29, 3
      %p162 = por %p160, %p161
      %p163 = scmp.ne.s32.totalorder %s155, %s158
      %p164 = scmp.eq.s32.totalorder %s29, 0
      %p165 = por %p163, %p164
      %p166 = scmp.ne.s32.totalorder %s155, %s158
      %p167 = scmp.eq.s32.totalorder %s34, 3
      %p168 = por %p166, %p167
      %p169 = scmp.ne.s32.totalorder %s158, %s159
      %p170 = scmp.eq.s32.totalorder %s34, 0
      %p171 = por %p169, %p170
      %p172 = scmp.ne.s32.totalorder %s158, %s159
      %p173 = scmp.eq.s32.totalorder %s35, 3
      %p174 = por %p172, %p173
      %p176 = scmp.ne.s32.totalorder %s159, %s175
      %p177 = scmp.eq.s32.totalorder %s35, 0
      %p178 = por %p176, %p177
      %s179 = ssub.s32 %s37, %s44
      %p180 = scmp.eq.s32.totalorder %s179, 0
      %s182 = sadd.s32 %s181, 1
      %s183 = scalar_select %p180, %s181, %s182
      %p186 = pneg %p180
      %p187 = scmp.eq.s32.totalorder %s29, 3
      %p188 = por %p186, %p187
      %p189 = scmp.ne.s32.totalorder %s181, %s184
      %p190 = scmp.eq.s32.totalorder %s29, 0
      %p191 = por %p189, %p190
      %p192 = scmp.ne.s32.totalorder %s181, %s184
      %p193 = scmp.eq.s32.totalorder %s34, 3
      %p194 = por %p192, %p193
      %p195 = scmp.ne.s32.totalorder %s184, %s185
      %p196 = scmp.eq.s32.totalorder %s34, 0
      %p197 = por %p195, %p196
      %p198 = scmp.ne.s32.totalorder %s184, %s185
      %p199 = scmp.eq.s32.totalorder %s35, 3
      %p200 = por %p198, %p199
      %p202 = scmp.ne.s32.totalorder %s185, %s201
      %p203 = scmp.eq.s32.totalorder %s35, 0
      %p204 = por %p202, %p203
      %s205 = ssub.s32 %s37, %s44
      %p206 = scmp.eq.s32.totalorder %s205, 0
      %s208 = sadd.s32 %s207, 1
      %s209 = scalar_select %p206, %s207, %s208
      %p212 = pneg %p206
      %p213 = scmp.eq.s32.totalorder %s29, 3
      %p214 = por %p212, %p213
      %p215 = scmp.ne.s32.totalorder %s207, %s210
      %p216 = scmp.eq.s32.totalorder %s29, 0
      %p217 = por %p215, %p216
      %p218 = scmp.ne.s32.totalorder %s207, %s210
      %p219 = scmp.eq.s32.totalorder %s34, 3
      %p220 = por %p218, %p219
      %p221 = scmp.ne.s32.totalorder %s210, %s211
      %p222 = scmp.eq.s32.totalorder %s34, 0
      %p223 = por %p221, %p222
      %p224 = scmp.ne.s32.totalorder %s210, %s211
      %p225 = scmp.eq.s32.totalorder %s35, 3
      %p226 = por %p224, %p225
      %p228 = scmp.ne.s32.totalorder %s211, %s227
      %p229 = scmp.eq.s32.totalorder %s35, 0
      %p230 = por %p228, %p229
      %s231 = ssub.s32 %s37, %s44
      %p232 = scmp.eq.s32.totalorder %s231, 0
      %s234 = sadd.s32 %s233, 1
      %s235 = scalar_select %p232, %s233, %s234
      %p238 = pneg %p232
      %p239 = scmp.eq.s32.totalorder %s29, 3
      %p240 = por %p238, %p239
      %p241 = scmp.ne.s32.totalorder %s233, %s236
      %p242 = scmp.eq.s32.totalorder %s29, 0
      %p243 = por %p241, %p242
      %p244 = scmp.ne.s32.totalorder %s233, %s236
      %p245 = scmp.eq.s32.totalorder %s34, 3
      %p246 = por %p244, %p245
      %p247 = scmp.ne.s32.totalorder %s236, %s237
      %p248 = scmp.eq.s32.totalorder %s34, 0
      %p249 = por %p247, %p248
      %p250 = scmp.ne.s32.totalorder %s236, %s237
      %p251 = scmp.eq.s32.totalorder %s35, 3
      %p252 = por %p250, %p251
      %p254 = scmp.ne.s32.totalorder %s237, %s253
      %p255 = scmp.eq.s32.totalorder %s35, 0
      %p256 = por %p254, %p255
      %s257 = ssub.s32 %s37, %s44
      %p258 = scmp.eq.s32.totalorder %s257, 0
      %s260 = sadd.s32 %s259, 1
      %s261 = scalar_select %p258, %s259, %s260
      %p264 = pneg %p258
      %p265 = scmp.eq.s32.totalorder %s29, 3
      %p266 = por %p264, %p265
      %p267 = scmp.ne.s32.totalorder %s259, %s262
      %p268 = scmp.eq.s32.totalorder %s29, 0
      %p269 = por %p267, %p268
      %p270 = scmp.ne.s32.totalorder %s259, %s262
      %p271 = scmp.eq.s32.totalorder %s34, 3
      %p272 = por %p270, %p271
      %p273 = scmp.ne.s32.totalorder %s262, %s263
      %p274 = scmp.eq.s32.totalorder %s34, 0
      %p275 = por %p273, %p274
      %p276 = scmp.ne.s32.totalorder %s262, %s263
      %p277 = scmp.eq.s32.totalorder %s35, 3
      %p278 = por %p276, %p277
      %p280 = scmp.ne.s32.totalorder %s263, %s279
      %p281 = scmp.eq.s32.totalorder %s35, 0
      %p282 = por %p280, %p281
      %s283 = ssub.s32 %s37, %s44
      %p284 = scmp.eq.s32.totalorder %s283, 0
      %s286 = sadd.s32 %s285, 1
      %s287 = scalar_select %p284, %s285, %s286
      %p290 = pneg %p284
      %p291 = scmp.eq.s32.totalorder %s29, 3
      %p292 = por %p290, %p291
      %p293 = scmp.ne.s32.totalorder %s285, %s288
      %p294 = scmp.eq.s32.totalorder %s29, 0
      %p295 = por %p293, %p294
      %p296 = scmp.ne.s32.totalorder %s285, %s288
      %p297 = scmp.eq.s32.totalorder %s34, 3
      %p298 = por %p296, %p297
      %p299 = scmp.ne.s32.totalorder %s288, %s289
      %p300 = scmp.eq.s32.totalorder %s34, 0
      %p301 = por %p299, %p300
      %p302 = scmp.ne.s32.totalorder %s288, %s289
      %p303 = scmp.eq.s32.totalorder %s35, 3
      %p304 = por %p302, %p303
      %p306 = scmp.ne.s32.totalorder %s289, %s305
      %p307 = scmp.eq.s32.totalorder %s35, 0
      %p308 = por %p306, %p307
      %s309 = ssub.s32 %s37, %s44
      %p310 = scmp.eq.s32.totalorder %s309, 0
      %s312 = sadd.s32 %s311, 1
      %s313 = scalar_select %p310, %s311, %s312
      %p316 = pneg %p310
      %p317 = scmp.eq.s32.totalorder %s29, 3
      %p318 = por %p316, %p317
      %p319 = scmp.ne.s32.totalorder %s311, %s314
      %p320 = scmp.eq.s32.totalorder %s29, 0
      %p321 = por %p319, %p320
      %p322 = scmp.ne.s32.totalorder %s311, %s314
      %p323 = scmp.eq.s32.totalorder %s34, 3
      %p324 = por %p322, %p323
      %p325 = scmp.ne.s32.totalorder %s314, %s315
      %p326 = scmp.eq.s32.totalorder %s34, 0
      %p327 = por %p325, %p326
      %p328 = scmp.ne.s32.totalorder %s314, %s315
      %p329 = scmp.eq.s32.totalorder %s35, 3
      %p330 = por %p328, %p329
      %p332 = scmp.ne.s32.totalorder %s315, %s331
      %p333 = scmp.eq.s32.totalorder %s35, 0
      %p334 = por %p332, %p333
      %s335 = ssub.s32 %s37, %s44
      %p336 = scmp.eq.s32.totalorder %s335, 0
      %s338 = sadd.s32 %s337, 1
      %s339 = scalar_select %p336, %s337, %s338
      %p342 = pneg %p336
      %p343 = scmp.eq.s32.totalorder %s29, 3
      %p344 = por %p342, %p343
      %p345 = scmp.ne.s32.totalorder %s337, %s340
      %p346 = scmp.eq.s32.totalorder %s29, 0
      %p347 = por %p345, %p346
      %p348 = scmp.ne.s32.totalorder %s337, %s340
      %p349 = scmp.eq.s32.totalorder %s34, 3
      %p350 = por %p348, %p349
      %p351 = scmp.ne.s32.totalorder %s340, %s341
      %p352 = scmp.eq.s32.totalorder %s34, 0
      %p353 = por %p351, %p352
      %p354 = scmp.ne.s32.totalorder %s340, %s341
      %p355 = scmp.eq.s32.totalorder %s35, 3
      %p356 = por %p354, %p355
      %p358 = scmp.ne.s32.totalorder %s341, %s357
      %p359 = scmp.eq.s32.totalorder %s35, 0
      %p360 = por %p358, %p359
      %s361 = ssub.s32 %s37, %s44
      %p362 = scmp.eq.s32.totalorder %s361, 0
      %s364 = sadd.s32 %s363, 1
      %s365 = scalar_select %p362, %s363, %s364
      %p368 = pneg %p362
      %p369 = scmp.eq.s32.totalorder %s29, 3
      %p370 = por %p368, %p369
      %p371 = scmp.ne.s32.totalorder %s363, %s366
      %p372 = scmp.eq.s32.totalorder %s29, 0
      %p373 = por %p371, %p372
      %p374 = scmp.ne.s32.totalorder %s363, %s366
      %p375 = scmp.eq.s32.totalorder %s34, 3
      %p376 = por %p374, %p375
      %p377 = scmp.ne.s32.totalorder %s366, %s367
      %p378 = scmp.eq.s32.totalorder %s34, 0
      %p379 = por %p377, %p378
      %p380 = scmp.ne.s32.totalorder %s366, %s367
      %p381 = scmp.eq.s32.totalorder %s35, 3
      %p382 = por %p380, %p381
      %p384 = scmp.ne.s32.totalorder %s367, %s383
      %p385 = scmp.eq.s32.totalorder %s35, 0
      %p386 = por %p384, %p385
      %s387 = ssub.s32 %s37, %s44
      %p388 = scmp.eq.s32.totalorder %s387, 0
      %s390 = sadd.s32 %s389, 1
      %s391 = scalar_select %p388, %s389, %s390
      %p394 = pneg %p388
      %p395 = scmp.eq.s32.totalorder %s29, 3
      %p396 = por %p394, %p395
      %p397 = scmp.ne.s32.totalorder %s389, %s392
      %p398 = scmp.eq.s32.totalorder %s29, 0
      %p399 = por %p397, %p398
      %p400 = scmp.ne.s32.totalorder %s389, %s392
      %p401 = scmp.eq.s32.totalorder %s34, 3
      %p402 = por %p400, %p401
      %p403 = scmp.ne.s32.totalorder %s392, %s393
      %p404 = scmp.eq.s32.totalorder %s34, 0
      %p405 = por %p403, %p404
      %p406 = scmp.ne.s32.totalorder %s392, %s393
      %p407 = scmp.eq.s32.totalorder %s35, 3
      %p408 = por %p406, %p407
      %p410 = scmp.ne.s32.totalorder %s393, %s409
      %p411 = scmp.eq.s32.totalorder %s35, 0
      %p412 = por %p410, %p411
      %s413 = ssub.s32 %s36, %s48
      %p414 = scmp.eq.s32.totalorder %s413, 0
      %s416 = sadd.s32 %s415, 1
      %s417 = scalar_select %p414, %s415, %s416
      %p420 = pneg %p414
      %p421 = scmp.eq.s32.totalorder %s29, 3
      %p422 = por %p420, %p421
      %p423 = scmp.ne.s32.totalorder %s415, %s418
      %p424 = scmp.eq.s32.totalorder %s29, 0
      %p425 = por %p423, %p424
      %p426 = scmp.ne.s32.totalorder %s415, %s418
      %p427 = scmp.eq.s32.totalorder %s34, 3
      %p428 = por %p426, %p427
      %p429 = scmp.ne.s32.totalorder %s418, %s419
      %p430 = scmp.eq.s32.totalorder %s34, 0
      %p431 = por %p429, %p430
      %p432 = scmp.ne.s32.totalorder %s418, %s419
      %p433 = scmp.eq.s32.totalorder %s35, 3
      %p434 = por %p432, %p433
      %p436 = scmp.ne.s32.totalorder %s419, %s435
      %p437 = scmp.eq.s32.totalorder %s35, 0
      %p438 = por %p436, %p437
      %p439 = scmp.le.s32.totalorder 1, %s29
      %p440 = scmp.lt.s32.totalorder %s29, 5
      %p441 = pnand %p439, %p440
      %p442 = pneg %p441
      // Predicated region
      $region9: #{tpu_custom_call.1} parent=5 // pred_check
        _
      $region10: #{tpu_custom_call.1} parent=5 // pred_check_branch
        %444 = sbr.rel (%p441) target = $region12
      $region11: #{tpu_custom_call.1} parent=5 // pred_region
        %s445 = ssub.s32 %s29, 1
      $region12: #{tpu_custom_call.1} parent=5 // pred_fallthru
        _
      %p446 = scmp.lt.s32.totalorder %s29, 4
      // Predicated region
      $region13: #{tpu_custom_call.1} parent=5 // pred_check
        %p447 = pneg %p446
      $region14: #{tpu_custom_call.1} parent=5 // pred_check_branch
        %449 = sbr.rel (%p447) target = $region16
      $region15: #{tpu_custom_call.1} parent=5 // pred_region
        // Predicated region
        $region17: #{tpu_custom_call.1} parent=15 // pred_check
          %p450 = pneg %p61
        $region18: #{tpu_custom_call.1} parent=15 // pred_check_branch
          %452 = sbr.rel (%p450) target = $region20
        $region19: #{tpu_custom_call.1} parent=15 // pred_region
          %s453 = sand.u32 %s51, 1
          %s454 = scalar_lea.sflag [#allocation3], %s453
          %s455 = sand.u32 %s51, 1
          %s456 = smul.addr %s455, 8
          %s457 = scalar_lea.vmem [#allocation2], %s456
          %s459 = ssub.s32 128, 128
          %460 = vsyncadd %s454, %s459
          %s461 = smul.addr %s36, 128
          %s462 = scalar_lea.hbm %s0, %s461
          %s464 = sshll.u32 %s457, 4
          %s465 = int_to_ptr.vmem [resolvable:$true] %s464
          %467 = dma.hbm_to_vmem [thread:$0]  %s462, 128, %s465, %s454
        $region20: #{tpu_custom_call.1} parent=15 // pred_fallthru
          _
        // Predicated region
        $region21: #{tpu_custom_call.1} parent=15 // pred_check
          %p468 = pneg %p87
        $region22: #{tpu_custom_call.1} parent=15 // pred_check_branch
          %470 = sbr.rel (%p468) target = $region24
        $region23: #{tpu_custom_call.1} parent=15 // pred_region
          %p471 = scmp.lt.s32.totalorder %s36, 1
          %s472 = scalar_select %p471, %s36, 1
          %s473 = smul.addr %s472, 4
          %s474 = smul.addr %s473, 8
          %s475 = scalar_lea.vmem %s1, %s474
        $region24: #{tpu_custom_call.1} parent=15 // pred_fallthru
          _
        // Predicated region
        $region25: #{tpu_custom_call.1} parent=15 // pred_check
          %p476 = pneg %p113
        $region26: #{tpu_custom_call.1} parent=15 // pred_check_branch
          %478 = sbr.rel (%p476) target = $region28
        $region27: #{tpu_custom_call.1} parent=15 // pred_region
          %p479 = scmp.lt.s32.totalorder %s37, 1
          %s480 = scalar_select %p479, %s37, 1
          %s481 = smul.addr %s480, 4
          %s482 = smul.addr %s481, 8
          %s483 = scalar_lea.vmem %s2, %s482
        $region28: #{tpu_custom_call.1} parent=15 // pred_fallthru
          _
        // Predicated region
        $region29: #{tpu_custom_call.1} parent=15 // pred_check
          %p484 = pneg %p139
        $region30: #{tpu_custom_call.1} parent=15 // pred_check_branch
          %486 = sbr.rel (%p484) target = $region32
        $region31: #{tpu_custom_call.1} parent=15 // pred_region
          %p487 = scmp.lt.s32.totalorder %s37, 1
          %s488 = scalar_select %p487, %s37, 1
          %s489 = scalar_lea.vmem %s3, %s488
        $region32: #{tpu_custom_call.1} parent=15 // pred_fallthru
          _
        // Predicated region
        $region33: #{tpu_custom_call.1} parent=15 // pred_check
          %p490 = pneg %p165
        $region34: #{tpu_custom_call.1} parent=15 // pred_check_branch
          %492 = sbr.rel (%p490) target = $region36
        $region35: #{tpu_custom_call.1} parent=15 // pred_region
          %p493 = scmp.lt.s32.totalorder %s37, 1
          %s494 = scalar_select %p493, %s37, 1
          %s495 = smul.addr %s494, 4
          %s496 = smul.addr %s495, 8
          %s497 = scalar_lea.vmem %s4, %s496
        $region36: #{tpu_custom_call.1} parent=15 // pred_fallthru
          _
        // Predicated region
        $region37: #{tpu_custom_call.1} parent=15 // pred_check
          %p498 = pneg %p191
        $region38: #{tpu_custom_call.1} parent=15 // pred_check_branch
          %500 = sbr.rel (%p498) target = $region40
        $region39: #{tpu_custom_call.1} parent=15 // pred_region
          %p501 = scmp.lt.s32.totalorder %s37, 1
          %s502 = scalar_select %p501, %s37, 1
          %s503 = scalar_lea.vmem %s5, %s502
        $region40: #{tpu_custom_call.1} parent=15 // pred_fallthru
          _
        // Predicated region
        $region41: #{tpu_custom_call.1} parent=15 // pred_check
          %p504 = pneg %p217
        $region42: #{tpu_custom_call.1} parent=15 // pred_check_branch
          %506 = sbr.rel (%p504) target = $region44
        $region43: #{tpu_custom_call.1} parent=15 // pred_region
          %p507 = scmp.lt.s32.totalorder %s37, 1
          %s508 = scalar_select %p507, %s37, 1
          %s509 = scalar_lea.vmem %s6, %s508
        $region44: #{tpu_custom_call.1} parent=15 // pred_fallthru
          _
        // Predicated region
        $region45: #{tpu_custom_call.1} parent=15 // pred_check
          %p510 = pneg %p243
        $region46: #{tpu_custom_call.1} parent=15 // pred_check_branch
          %512 = sbr.rel (%p510) target = $region48
        $region47: #{tpu_custom_call.1} parent=15 // pred_region
          %p513 = scmp.lt.s32.totalorder %s37, 1
          %s514 = scalar_select %p513, %s37, 1
          %s515 = scalar_lea.vmem %s7, %s514
        $region48: #{tpu_custom_call.1} parent=15 // pred_fallthru
          _
        // Predicated region
        $region49: #{tpu_custom_call.1} parent=15 // pred_check
          %p516 = pneg %p269
        $region50: #{tpu_custom_call.1} parent=15 // pred_check_branch
          %518 = sbr.rel (%p516) target = $region52
        $region51: #{tpu_custom_call.1} parent=15 // pred_region
          %p519 = scmp.lt.s32.totalorder %s37, 1
          %s520 = scalar_select %p519, %s37, 1
          %s521 = smul.addr %s520, 8
          %s522 = smul.addr %s521, 8
          %s523 = scalar_lea.vmem %s8, %s522
        $region52: #{tpu_custom_call.1} parent=15 // pred_fallthru
          _
        // Predicated region
        $region53: #{tpu_custom_call.1} parent=15 // pred_check
          %p524 = pneg %p295
        $region54: #{tpu_custom_call.1} parent=15 // pred_check_branch
          %526 = sbr.rel (%p524) target = $region56
        $region55: #{tpu_custom_call.1} parent=15 // pred_region
          %p527 = scmp.lt.s32.totalorder %s37, 1
          %s528 = scalar_select %p527, %s37, 1
          %s529 = scalar_lea.vmem %s9, %s528
        $region56: #{tpu_custom_call.1} parent=15 // pred_fallthru
          _
        // Predicated region
        $region57: #{tpu_custom_call.1} parent=15 // pred_check
          %p530 = pneg %p321
        $region58: #{tpu_custom_call.1} parent=15 // pred_check_branch
          %532 = sbr.rel (%p530) target = $region60
        $region59: #{tpu_custom_call.1} parent=15 // pred_region
          %s533 = sand.u32 %s311, 1
          %s534 = scalar_lea.sflag [#allocation6], %s533
          %s535 = sand.u32 %s311, 1
          %s536 = smul.addr %s535, 32
          %s537 = scalar_lea.vmem [#allocation5], %s536
          %s539 = ssub.s32 512, 512
          %540 = vsyncadd %s534, %s539
          %s541 = smul.addr %s37, 4
          %s542 = smul.addr %s541, 128
          %s543 = scalar_lea.hbm %s10, %s542
          %s544 = sshll.u32 %s537, 4
          %s545 = int_to_ptr.vmem [resolvable:$true] %s544
          %550 = dma.hbm_to_vmem [thread:$0]  %s543, 512, %s545, %s534, 128, 128, 8
        $region60: #{tpu_custom_call.1} parent=15 // pred_fallthru
          _
        // Predicated region
        $region61: #{tpu_custom_call.1} parent=15 // pred_check
          %p551 = pneg %p347
        $region62: #{tpu_custom_call.1} parent=15 // pred_check_branch
          %553 = sbr.rel (%p551) target = $region64
        $region63: #{tpu_custom_call.1} parent=15 // pred_region
          %p554 = scmp.lt.s32.totalorder %s37, 1
          %s555 = scalar_select %p554, %s37, 1
          %s556 = scalar_lea.vmem %s11, %s555
        $region64: #{tpu_custom_call.1} parent=15 // pred_fallthru
          _
        // Predicated region
        $region65: #{tpu_custom_call.1} parent=15 // pred_check
          %p557 = pneg %p373
        $region66: #{tpu_custom_call.1} parent=15 // pred_check_branch
          %559 = sbr.rel (%p557) target = $region68
        $region67: #{tpu_custom_call.1} parent=15 // pred_region
          %p560 = scmp.lt.s32.totalorder %s37, 1
          %s561 = scalar_select %p560, %s37, 1
          %s562 = scalar_lea.vmem %s12, %s561
        $region68: #{tpu_custom_call.1} parent=15 // pred_fallthru
          _
        // Predicated region
        $region69: #{tpu_custom_call.1} parent=15 // pred_check
          %p563 = pneg %p399
        $region70: #{tpu_custom_call.1} parent=15 // pred_check_branch
          %565 = sbr.rel (%p563) target = $region72
        $region71: #{tpu_custom_call.1} parent=15 // pred_region
          %p566 = scmp.lt.s32.totalorder %s37, 1
          %s567 = scalar_select %p566, %s37, 1
          %s568 = scalar_lea.vmem %s13, %s567
        $region72: #{tpu_custom_call.1} parent=15 // pred_fallthru
          _
      $region16: #{tpu_custom_call.1} parent=5 // pred_fallthru
        _
      %p569 = scmp.le.s32.totalorder 1, %s29
      %p570 = scmp.lt.s32.totalorder %s29, 5
      %p571 = pnand %p569, %p570
      %p572 = pneg %p571
      // Predicated region
      $region73: #{tpu_custom_call.1} parent=5 // pred_check
        _
      $region74: #{tpu_custom_call.1} parent=5 // pred_check_branch
        %574 = sbr.rel (%p571) target = $region76
      $region75: #{tpu_custom_call.1} parent=5 // pred_region
        %s575 = ssub.s32 %s29, 1
        %s576 = sand.u32 %s54, 1
        %s577 = scalar_lea.sflag [#allocation3], %s576
        %s578 = sand.u32 %s54, 1
        %s579 = smul.addr %s578, 8
        %s580 = scalar_lea.vmem [#allocation2], %s579
        // Predicated region
        $region77: #{tpu_custom_call.1} parent=75 // pred_check
          %p581 = pneg %p67
        $region78: #{tpu_custom_call.1} parent=75 // pred_check_branch
          %583 = sbr.rel (%p581) target = $region80
        $region79: #{tpu_custom_call.1} parent=75 // pred_region
          %584 = dma.done %s577, 128
        $region80: #{tpu_custom_call.1} parent=75 // pred_fallthru
          _
        %s585 = sand.u32 %s314, 1
        %s586 = scalar_lea.sflag [#allocation6], %s585
        %s587 = sand.u32 %s314, 1
        %s588 = smul.addr %s587, 32
        %s589 = scalar_lea.vmem [#allocation5], %s588
        // Predicated region
        $region81: #{tpu_custom_call.1} parent=75 // pred_check
          %p590 = pneg %p327
        $region82: #{tpu_custom_call.1} parent=75 // pred_check_branch
          %592 = sbr.rel (%p590) target = $region84
        $region83: #{tpu_custom_call.1} parent=75 // pred_region
          %593 = dma.done %s586, 512
        $region84: #{tpu_custom_call.1} parent=75 // pred_fallthru
          _
        %s594 = sand.u32 %s54, 1
        %s595 = scalar_lea.sflag [#allocation3], %s594
        %s596 = sand.u32 %s54, 1
        %s597 = smul.addr %s596, 8
        %s598 = scalar_lea.vmem [#allocation2], %s597
        %p599 = pneg %p67
        %p600 = pneg %p64
        %p601 = scmp.lt.s32.totalorder %s38, 1
        %s602 = scalar_select %p601, %s38, 1
        %s603 = smul.addr %s602, 4
        %s604 = smul.addr %s603, 8
        %s605 = scalar_lea.vmem %s1, %s604
        %p606 = pneg %p93
        %p607 = pneg %p90
        %p608 = scmp.lt.s32.totalorder %s39, 1
        %s609 = scalar_select %p608, %s39, 1
        %s610 = smul.addr %s609, 4
        %s611 = smul.addr %s610, 8
        %s612 = scalar_lea.vmem %s2, %s611
        %p613 = pneg %p119
        %p614 = pneg %p116
        %p615 = scmp.lt.s32.totalorder %s39, 1
        %s616 = scalar_select %p615, %s39, 1
        %s617 = scalar_lea.vmem %s3, %s616
        %p618 = pneg %p145
        %p619 = pneg %p142
        %p620 = scmp.lt.s32.totalorder %s39, 1
        %s621 = scalar_select %p620, %s39, 1
        %s622 = smul.addr %s621, 4
        %s623 = smul.addr %s622, 8
        %s624 = scalar_lea.vmem %s4, %s623
        %p625 = pneg %p171
        %p626 = pneg %p168
        %p627 = scmp.lt.s32.totalorder %s39, 1
        %s628 = scalar_select %p627, %s39, 1
        %s629 = scalar_lea.vmem %s5, %s628
        %p630 = pneg %p197
        %p631 = pneg %p194
        %p632 = scmp.lt.s32.totalorder %s39, 1
        %s633 = scalar_select %p632, %s39, 1
        %s634 = scalar_lea.vmem %s6, %s633
        %p635 = pneg %p223
        %p636 = pneg %p220
        %p637 = scmp.lt.s32.totalorder %s39, 1
        %s638 = scalar_select %p637, %s39, 1
        %s639 = scalar_lea.vmem %s7, %s638
        %p640 = pneg %p249
        %p641 = pneg %p246
        %p642 = scmp.lt.s32.totalorder %s39, 1
        %s643 = scalar_select %p642, %s39, 1
        %s644 = smul.addr %s643, 8
        %s645 = smul.addr %s644, 8
        %s646 = scalar_lea.vmem %s8, %s645
        %p647 = pneg %p275
        %p648 = pneg %p272
        %p649 = scmp.lt.s32.totalorder %s39, 1
        %s650 = scalar_select %p649, %s39, 1
        %s651 = scalar_lea.vmem %s9, %s650
        %p652 = pneg %p301
        %p653 = pneg %p298
        %s654 = sand.u32 %s314, 1
        %s655 = scalar_lea.sflag [#allocation6], %s654
        %s656 = sand.u32 %s314, 1
        %s657 = smul.addr %s656, 32
        %s658 = scalar_lea.vmem [#allocation5], %s657
        %p659 = pneg %p327
        %p660 = pneg %p324
        %p661 = scmp.lt.s32.totalorder %s39, 1
        %s662 = scalar_select %p661, %s39, 1
        %s663 = scalar_lea.vmem %s11, %s662
        %p664 = pneg %p353
        %p665 = pneg %p350
        %p666 = scmp.lt.s32.totalorder %s39, 1
        %s667 = scalar_select %p666, %s39, 1
        %s668 = scalar_lea.vmem %s12, %s667
        %p669 = pneg %p379
        %p670 = pneg %p376
        %p671 = scmp.lt.s32.totalorder %s39, 1
        %s672 = scalar_select %p671, %s39, 1
        %s673 = scalar_lea.vmem %s13, %s672
        %p674 = pneg %p405
        %p675 = pneg %p402
        %p676 = pneg %p431
        %p677 = pneg %p428
        %s678 = sand.u32 %s418, 1
        %s679 = scalar_lea.sflag [#allocation4], %s678
        %s680 = sand.u32 %s418, 1
        %s681 = smul.addr %s680, 8
        %s682 = scalar_lea.vmem [#allocation7], %s681
        %p683 = scmp.lt.s32.totalorder %s38, 1
        %s684 = scalar_select %p683, %s38, 1
        %s685 = smul.addr %s684, 4
        %s686 = smul.addr %s685, 8
        %s687 = scalar_lea.vmem %s1, %s686
        %p688 = scmp.lt.s32.totalorder %s39, 1
        %s689 = scalar_select %p688, %s39, 1
        %s690 = smul.addr %s689, 4
        %s691 = smul.addr %s690, 8
        %s692 = scalar_lea.vmem %s2, %s691
        %p693 = scmp.lt.s32.totalorder %s39, 1
        %s694 = scalar_select %p693, %s39, 1
        %s695 = scalar_lea.vmem %s3, %s694
        %p696 = scmp.lt.s32.totalorder %s39, 1
        %s697 = scalar_select %p696, %s39, 1
        %s698 = smul.addr %s697, 4
        %s699 = smul.addr %s698, 8
        %s700 = scalar_lea.vmem %s4, %s699
        %p701 = scmp.lt.s32.totalorder %s39, 1
        %s702 = scalar_select %p701, %s39, 1
        %s703 = scalar_lea.vmem %s5, %s702
        %p704 = scmp.lt.s32.totalorder %s39, 1
        %s705 = scalar_select %p704, %s39, 1
        %s706 = scalar_lea.vmem %s6, %s705
        %p707 = scmp.lt.s32.totalorder %s39, 1
        %s708 = scalar_select %p707, %s39, 1
        %s709 = scalar_lea.vmem %s7, %s708
        %p710 = scmp.lt.s32.totalorder %s39, 1
        %s711 = scalar_select %p710, %s39, 1
        %s712 = smul.addr %s711, 8
        %s713 = smul.addr %s712, 8
        %s714 = scalar_lea.vmem %s8, %s713
        %p715 = scmp.lt.s32.totalorder %s39, 1
        %s716 = scalar_select %p715, %s39, 1
        %s717 = scalar_lea.vmem %s9, %s716
        %p718 = scmp.lt.s32.totalorder %s39, 1
        %s719 = scalar_select %p718, %s39, 1
        %s720 = scalar_lea.vmem %s11, %s719
        %p721 = scmp.lt.s32.totalorder %s39, 1
        %s722 = scalar_select %p721, %s39, 1
        %s723 = scalar_lea.vmem %s12, %s722
        %p724 = scmp.lt.s32.totalorder %s39, 1
        %s725 = scalar_select %p724, %s39, 1
        %s726 = scalar_lea.vmem %s13, %s725
        %p727 = scmp.eq.s32.totalorder %s39, 0
        // Predicated region
        $region85: #{tpu_custom_call.1} parent=75 // pred_check
          %p728 = pneg %p727
        $region86: #{tpu_custom_call.1} parent=75 // pred_check_branch
          %730 = sbr.rel (%p728) target = $region88
        $region87: #{tpu_custom_call.1} parent=75 // pred_region
          %v731 = vld [vmem:[%s580] sm:$0xff]
          %vm732 = vcmask 261120
          %733 = vst.msk [vmem:[%s682] sm:$0xff] %vm732, %v731
        $region88: #{tpu_custom_call.1} parent=75 // pred_fallthru
          _
        %v734 = vld [vmem:[%s682] sm:$0xff]
        %v735 = vld [vmem:[%s692] sm:$0xff]
        %v736 = vld [vmem:[%s692 + $0x8] sm:$0xff]
        %v737 = vld [vmem:[%s692 + $0x10] sm:$0xff]
        %v738 = vld [vmem:[%s692 + $0x18] sm:$0xff]
        %v739 = vld [vmem:[%s695] sm:$0x1]
        %v741 = vlaneseq
        %v742 = vshrl.u32 %v741, 7
        %v743 = vsub.s32 0, %v742
        %v744 = vrot.slane %v739, %v743
        %vm746 = vcmask 261120
        %v748 = vsel %vm746, %v734, 0
        %v751 = vsel %vm746, %v735, 0
        %v754 = vsel %vm746, %v736, 0
        %v757 = vsel %vm746, %v737, 0
        %v760 = vsel %vm746, %v738, 0
        %762 = vmatprep.subr.mxu0 0.0
        %763 = vmatpush1.xpose.msra.mxu0 %v751
        %764 = vmatprep.subr.mxu0 0.0
        %765 = vmatpush1.xpose.msra.mxu0 %v754
        %766 = vmatprep.subr.mxu0 0.0
        %767 = vmatpush1.xpose.msra.mxu0 %v757
        %768 = vmatprep.subr.mxu0 0.0
        %769 = vmatpush1.xpose.msra.mxu0 %v760
        %770 = vmatprep.subr.mxu0 0.0
        %771 = vmatpush1.xpose.msra.mxu0 0.0
        %772 = vmatprep.subr.mxu0 0.0
        %773 = vmatpush1.xpose.msra.mxu0 0.0
        %774 = vmatprep.subr.mxu0 0.0
        %775 = vmatpush1.xpose.msra.mxu0 0.0
        %776 = vmatprep.subr.mxu0 0.0
        %777 = vmatpush1.xpose.msra.mxu0 0.0
        %778 = vmatprep.subr.mxu0 0.0
        %779 = vmatpush1.xpose.msra.mxu0 0.0
        %780 = vmatprep.subr.mxu0 0.0
        %781 = vmatpush1.xpose.msra.mxu0 0.0
        %782 = vmatprep.subr.mxu0 0.0
        %783 = vmatpush1.xpose.msra.mxu0 0.0
        %784 = vmatprep.subr.mxu0 0.0
        %785 = vmatpush1.xpose.msra.mxu0 0.0
        %786 = vmatprep.subr.mxu0 0.0
        %787 = vmatpush1.xpose.msra.mxu0 0.0
        %788 = vmatprep.subr.mxu0 0.0
        %789 = vmatpush1.xpose.msra.mxu0 0.0
        %790 = vmatprep.subr.mxu0 0.0
        %791 = vmatpush1.xpose.msra.mxu0 0.0
        %792 = vmatprep.subr.mxu0 0.0
        %793 = vmatpush1.xpose.msra.mxu0 0.0
        %794 = vmatprep.subr.mxu0 0.0
        %795 = vmatpush1.xpose.msra.mxu0 0.0
        %796 = vmatprep.subr.mxu0 0.0
        %797 = vmatpush1.xpose.msra.mxu0 0.0
        %798 = vmatprep.subr.mxu0 0.0
        %799 = vmatpush1.xpose.msra.mxu0 0.0
        %800 = vmatprep.subr.mxu0 0.0
        %801 = vmatpush1.xpose.msra.mxu0 0.0
        %802 = vmatprep.subr.mxu0 0.0
        %803 = vmatpush1.xpose.msra.mxu0 0.0
        %804 = vmatprep.subr.mxu0 0.0
        %805 = vmatpush1.xpose.msra.mxu0 0.0
        %806 = vmatprep.subr.mxu0 0.0
        %807 = vmatpush1.xpose.msra.mxu0 0.0
        %808 = vmatprep.subr.mxu0 0.0
        %809 = vmatpush1.xpose.msra.mxu0 0.0
        %810 = vmatprep.subr.mxu0 0.0
        %811 = vmatpush1.xpose.msra.mxu0 0.0
        %812 = vmatprep.subr.mxu0 0.0
        %813 = vmatpush1.xpose.msra.mxu0 0.0
        %814 = vmatprep.subr.mxu0 0.0
        %815 = vmatpush1.xpose.msra.mxu0 0.0
        %816 = vmatprep.subr.mxu0 0.0
        %817 = vmatpush1.xpose.msra.mxu0 0.0
        %818 = vmatprep.subr.mxu0 0.0
        %819 = vmatpush1.xpose.msra.mxu0 0.0
        %820 = vmatprep.subr.mxu0 0.0
        %821 = vmatpush1.xpose.msra.mxu0 0.0
        %822 = vmatprep.subr.mxu0 0.0
        %823 = vmatpush1.xpose.msra.mxu0 0.0
        %824 = vmatprep.subr.mxu0 0.0
        %825 = vmatpush1.xpose.msra.mxu0 0.0
        %826 = vmatprep.mubr.f32.mxu0 0.0
        %827 = vmatmul.mubr.f32.gmra.mrb[0].mxu0 %v748
        %v828 = vpop.f32.mrb[0].mxu0
        %v829 = vadd.f32 %v744, %v828
        %v830 = vpop.f32.mrb[0].mxu0
        %831 = vdwg.mxu0
        %vm832 = vcmask 64512
        %v834 = vsel %vm832, %v829, 0
        %836 = vmatprep.subr.mxu0 0.0
        %837 = vmatpush1.xpose.msra.mxu0 %v834
        %838 = vmatprep.subr.mxu0 0.0
        %839 = vmatpush1.xpose.msra.mxu0 0.0
        %840 = vmatprep.subr.mxu0 0.0
        %841 = vmatpush1.xpose.msra.mxu0 0.0
        %842 = vmatprep.subr.mxu0 0.0
        %843 = vmatpush1.xpose.msra.mxu0 0.0
        %844 = vmatprep.subr.mxu0 0.0
        %845 = vmatpush1.xpose.msra.mxu0 0.0
        %846 = vmatprep.subr.mxu0 0.0
        %847 = vmatpush1.xpose.msra.mxu0 0.0
        %848 = vmatprep.subr.mxu0 0.0
        %849 = vmatpush1.xpose.msra.mxu0 0.0
        %850 = vmatprep.subr.mxu0 0.0
        %851 = vmatpush1.xpose.msra.mxu0 0.0
        %852 = vmatprep.subr.mxu0 0.0
        %853 = vmatpush1.xpose.msra.mxu0 0.0
        %854 = vmatprep.subr.mxu0 0.0
        %855 = vmatpush1.xpose.msra.mxu0 0.0
        %856 = vmatprep.subr.mxu0 0.0
        %857 = vmatpush1.xpose.msra.mxu0 0.0
        %858 = vmatprep.subr.mxu0 0.0
        %859 = vmatpush1.xpose.msra.mxu0 0.0
        %860 = vmatprep.subr.mxu0 0.0
        %861 = vmatpush1.xpose.msra.mxu0 0.0
        %862 = vmatprep.subr.mxu0 0.0
        %863 = vmatpush1.xpose.msra.mxu0 0.0
        %864 = vmatprep.subr.mxu0 0.0
        %865 = vmatpush1.xpose.msra.mxu0 0.0
        %866 = vmatprep.subr.mxu0 0.0
        %867 = vmatpush1.xpose.msra.mxu0 0.0
        %868 = vmatprep.subr.mxu0 0.0
        %869 = vmatpush1.xpose.msra.mxu0 0.0
        %870 = vmatprep.subr.mxu0 0.0
        %871 = vmatpush1.xpose.msra.mxu0 0.0
        %872 = vmatprep.subr.mxu0 0.0
        %873 = vmatpush1.xpose.msra.mxu0 0.0
        %874 = vmatprep.subr.mxu0 0.0
        %875 = vmatpush1.xpose.msra.mxu0 0.0
        %876 = vmatprep.subr.mxu0 0.0
        %877 = vmatpush1.xpose.msra.mxu0 0.0
        %878 = vmatprep.subr.mxu0 0.0
        %879 = vmatpush1.xpose.msra.mxu0 0.0
        %880 = vmatprep.subr.mxu0 0.0
        %881 = vmatpush1.xpose.msra.mxu0 0.0
        %882 = vmatprep.subr.mxu0 0.0
        %883 = vmatpush1.xpose.msra.mxu0 0.0
        %884 = vmatprep.subr.mxu0 0.0
        %885 = vmatpush1.xpose.msra.mxu0 0.0
        %886 = vmatprep.subr.mxu0 0.0
        %887 = vmatpush1.xpose.msra.mxu0 0.0
        %888 = vmatprep.subr.mxu0 0.0
        %889 = vmatpush1.xpose.msra.mxu0 0.0
        %890 = vmatprep.subr.mxu0 0.0
        %891 = vmatpush1.xpose.msra.mxu0 0.0
        %892 = vmatprep.subr.mxu0 0.0
        %893 = vmatpush1.xpose.msra.mxu0 0.0
        %894 = vmatprep.subr.mxu0 0.0
        %895 = vmatpush1.xpose.msra.mxu0 0.0
        %896 = vmatprep.subr.mxu0 0.0
        %897 = vmatpush1.xpose.msra.mxu0 0.0
        %898 = vmatprep.subr.mxu0 0.0
        %899 = vmatpush1.xpose.msra.mxu0 0.0
        %900 = vmatprep.mubr.f32.mxu0 0.0
        %901 = vmatmul.mubr.f32.gmra.mrb[0].mxu0 %v834
        %v902 = vpop.f32.mrb[0].mxu0
        %v903 = vadd.f32 0.0, %v902
        %v904 = vpop.f32.mrb[0].mxu0
        %905 = vdwg.mxu0
        %v906 = vmul.f32 %v903, 0.35355338
        %v907 = vld [vmem:[%s687] sm:$0xff]
        %v908 = vmul.f32 %v907, -1e+09
        %v909 = vadd.f32 %v906, %v908
        %v910 = vsel %vm832, %v909, -inf
        %911 = vmax.xlane.f32.xlu0 %v910
        %v912 = vpop.xlane.xlu0 %911
        %v913 = vsub.f32 %v909, %v912
        %v914 = vmul.f32 %v913, 1.442695
        %v915 = vpow.pop %v914
        %v916 = vsel %vm832, %v915, 0.0
        %917 = vadd.xlane.f32.xlu0 %v916
        %v918 = vpop.xlane.xlu0 %917
        %v919 = vrcp.pop %v918
        %v920 = vmul.f32 %v915, %v919
        %v922 = vsel %vm832, %v920, 0
        %924 = vmatprep.subr.mxu0 0.0
        %925 = vmatpush1.msra.mxu0 %v829
        %926 = vmatprep.subr.mxu0 0.0
        %927 = vmatpush1.msra.mxu0 0.0
        %928 = vmatprep.subr.mxu0 0.0
        %929 = vmatpush1.msra.mxu0 0.0
        %930 = vmatprep.subr.mxu0 0.0
        %931 = vmatpush1.msra.mxu0 0.0
        %932 = vmatprep.subr.mxu0 0.0
        %933 = vmatpush1.msra.mxu0 0.0
        %934 = vmatprep.subr.mxu0 0.0
        %935 = vmatpush1.msra.mxu0 0.0
        %936 = vmatprep.subr.mxu0 0.0
        %937 = vmatpush1.msra.mxu0 0.0
        %938 = vmatprep.subr.mxu0 0.0
        %939 = vmatpush1.msra.mxu0 0.0
        %940 = vmatprep.subr.mxu0 0.0
        %941 = vmatpush1.msra.mxu0 0.0
        %942 = vmatprep.subr.mxu0 0.0
        %943 = vmatpush1.msra.mxu0 0.0
        %944 = vmatprep.subr.mxu0 0.0
        %945 = vmatpush1.msra.mxu0 0.0
        %946 = vmatprep.subr.mxu0 0.0
        %947 = vmatpush1.msra.mxu0 0.0
        %948 = vmatprep.subr.mxu0 0.0
        %949 = vmatpush1.msra.mxu0 0.0
        %950 = vmatprep.subr.mxu0 0.0
        %951 = vmatpush1.msra.mxu0 0.0
        %952 = vmatprep.subr.mxu0 0.0
        %953 = vmatpush1.msra.mxu0 0.0
        %954 = vmatprep.subr.mxu0 0.0
        %955 = vmatpush1.msra.mxu0 0.0
        %956 = vmatprep.subr.mxu0 0.0
        %957 = vmatpush1.msra.mxu0 0.0
        %958 = vmatprep.subr.mxu0 0.0
        %959 = vmatpush1.msra.mxu0 0.0
        %960 = vmatprep.subr.mxu0 0.0
        %961 = vmatpush1.msra.mxu0 0.0
        %962 = vmatprep.subr.mxu0 0.0
        %963 = vmatpush1.msra.mxu0 0.0
        %964 = vmatprep.subr.mxu0 0.0
        %965 = vmatpush1.msra.mxu0 0.0
        %966 = vmatprep.subr.mxu0 0.0
        %967 = vmatpush1.msra.mxu0 0.0
        %968 = vmatprep.subr.mxu0 0.0
        %969 = vmatpush1.msra.mxu0 0.0
        %970 = vmatprep.subr.mxu0 0.0
        %971 = vmatpush1.msra.mxu0 0.0
        %972 = vmatprep.subr.mxu0 0.0
        %973 = vmatpush1.msra.mxu0 0.0
        %974 = vmatprep.subr.mxu0 0.0
        %975 = vmatpush1.msra.mxu0 0.0
        %976 = vmatprep.subr.mxu0 0.0
        %977 = vmatpush1.msra.mxu0 0.0
        %978 = vmatprep.subr.mxu0 0.0
        %979 = vmatpush1.msra.mxu0 0.0
        %980 = vmatprep.subr.mxu0 0.0
        %981 = vmatpush1.msra.mxu0 0.0
        %982 = vmatprep.subr.mxu0 0.0
        %983 = vmatpush1.msra.mxu0 0.0
        %984 = vmatprep.subr.mxu0 0.0
        %985 = vmatpush1.msra.mxu0 0.0
        %986 = vmatprep.subr.mxu0 0.0
        %987 = vmatpush1.msra.mxu0 0.0
        %988 = vmatprep.mubr.f32.mxu0 0.0
        %989 = vmatmul.mubr.f32.gmra.mrb[0].mxu0 %v922
        %v990 = vpop.f32.mrb[0].mxu0
        %v991 = vadd.f32 0.0, %v990
        %v992 = vpop.f32.mrb[0].mxu0
        %993 = vdwg.mxu0
        %994 = vrot.lane.b32.xlu0 %v829, 120
        %v995 = vpop.permute.xlu0 %994
        %v996 = vsel %vm832, %v995, 0
        %998 = vmatprep.subr.mxu0 0.0
        %999 = vmatpush1.xpose.msra.mxu0 %v996
        %1000 = vmatprep.subr.mxu0 0.0
        %1001 = vmatpush1.xpose.msra.mxu0 0.0
        %1002 = vmatprep.subr.mxu0 0.0
        %1003 = vmatpush1.xpose.msra.mxu0 0.0
        %1004 = vmatprep.subr.mxu0 0.0
        %1005 = vmatpush1.xpose.msra.mxu0 0.0
        %1006 = vmatprep.subr.mxu0 0.0
        %1007 = vmatpush1.xpose.msra.mxu0 0.0
        %1008 = vmatprep.subr.mxu0 0.0
        %1009 = vmatpush1.xpose.msra.mxu0 0.0
        %1010 = vmatprep.subr.mxu0 0.0
        %1011 = vmatpush1.xpose.msra.mxu0 0.0
        %1012 = vmatprep.subr.mxu0 0.0
        %1013 = vmatpush1.xpose.msra.mxu0 0.0
        %1014 = vmatprep.subr.mxu0 0.0
        %1015 = vmatpush1.xpose.msra.mxu0 0.0
        %1016 = vmatprep.subr.mxu0 0.0
        %1017 = vmatpush1.xpose.msra.mxu0 0.0
        %1018 = vmatprep.subr.mxu0 0.0
        %1019 = vmatpush1.xpose.msra.mxu0 0.0
        %1020 = vmatprep.subr.mxu0 0.0
        %1021 = vmatpush1.xpose.msra.mxu0 0.0
        %1022 = vmatprep.subr.mxu0 0.0
        %1023 = vmatpush1.xpose.msra.mxu0 0.0
        %1024 = vmatprep.subr.mxu0 0.0
        %1025 = vmatpush1.xpose.msra.mxu0 0.0
        %1026 = vmatprep.subr.mxu0 0.0
        %1027 = vmatpush1.xpose.msra.mxu0 0.0
        %1028 = vmatprep.subr.mxu0 0.0
        %1029 = vmatpush1.xpose.msra.mxu0 0.0
        %1030 = vmatprep.subr.mxu0 0.0
        %1031 = vmatpush1.xpose.msra.mxu0 0.0
        %1032 = vmatprep.subr.mxu0 0.0
        %1033 = vmatpush1.xpose.msra.mxu0 0.0
        %1034 = vmatprep.subr.mxu0 0.0
        %1035 = vmatpush1.xpose.msra.mxu0 0.0
        %1036 = vmatprep.subr.mxu0 0.0
        %1037 = vmatpush1.xpose.msra.mxu0 0.0
        %1038 = vmatprep.subr.mxu0 0.0
        %1039 = vmatpush1.xpose.msra.mxu0 0.0
        %1040 = vmatprep.subr.mxu0 0.0
        %1041 = vmatpush1.xpose.msra.mxu0 0.0
        %1042 = vmatprep.subr.mxu0 0.0
        %1043 = vmatpush1.xpose.msra.mxu0 0.0
        %1044 = vmatprep.subr.mxu0 0.0
        %1045 = vmatpush1.xpose.msra.mxu0 0.0
        %1046 = vmatprep.subr.mxu0 0.0
        %1047 = vmatpush1.xpose.msra.mxu0 0.0
        %1048 = vmatprep.subr.mxu0 0.0
        %1049 = vmatpush1.xpose.msra.mxu0 0.0
        %1050 = vmatprep.subr.mxu0 0.0
        %1051 = vmatpush1.xpose.msra.mxu0 0.0
        %1052 = vmatprep.subr.mxu0 0.0
        %1053 = vmatpush1.xpose.msra.mxu0 0.0
        %1054 = vmatprep.subr.mxu0 0.0
        %1055 = vmatpush1.xpose.msra.mxu0 0.0
        %1056 = vmatprep.subr.mxu0 0.0
        %1057 = vmatpush1.xpose.msra.mxu0 0.0
        %1058 = vmatprep.subr.mxu0 0.0
        %1059 = vmatpush1.xpose.msra.mxu0 0.0
        %1060 = vmatprep.subr.mxu0 0.0
        %1061 = vmatpush1.xpose.msra.mxu0 0.0
        %1062 = vmatprep.mubr.f32.mxu0 0.0
        %1063 = vmatmul.mubr.f32.gmra.mrb[0].mxu0 %v996
        %v1064 = vpop.f32.mrb[0].mxu0
        %v1065 = vadd.f32 0.0, %v1064
        %v1066 = vpop.f32.mrb[0].mxu0
        %1067 = vdwg.mxu0
        %v1068 = vmul.f32 %v1065, 0.35355338
        %s1069 = scalar_lea.vmem %s687, 8
        %v1070 = vld [vmem:[%s1069] sm:$0xff]
        %v1071 = vmul.f32 %v1070, -1e+09
        %v1072 = vadd.f32 %v1068, %v1071
        %v1073 = vsel %vm832, %v1072, -inf
        %1074 = vmax.xlane.f32.xlu0 %v1073
        %v1075 = vpop.xlane.xlu0 %1074
        %v1076 = vsub.f32 %v1072, %v1075
        %v1077 = vmul.f32 %v1076, 1.442695
        %v1078 = vpow.pop %v1077
        %v1079 = vsel %vm832, %v1078, 0.0
        %1080 = vadd.xlane.f32.xlu0 %v1079
        %v1081 = vpop.xlane.xlu0 %1080
        %v1082 = vrcp.pop %v1081
        %v1083 = vmul.f32 %v1078, %v1082
        %v1086 = vsel %vm832, %v1083, 0
        %1088 = vmatprep.subr.mxu0 0.0
        %1089 = vmatpush1.msra.mxu0 %v995
        %1090 = vmatprep.subr.mxu0 0.0
        %1091 = vmatpush1.msra.mxu0 0.0
        %1092 = vmatprep.subr.mxu0 0.0
        %1093 = vmatpush1.msra.mxu0 0.0
        %1094 = vmatprep.subr.mxu0 0.0
        %1095 = vmatpush1.msra.mxu0 0.0
        %1096 = vmatprep.subr.mxu0 0.0
        %1097 = vmatpush1.msra.mxu0 0.0
        %1098 = vmatprep.subr.mxu0 0.0
        %1099 = vmatpush1.msra.mxu0 0.0
        %1100 = vmatprep.subr.mxu0 0.0
        %1101 = vmatpush1.msra.mxu0 0.0
        %1102 = vmatprep.subr.mxu0 0.0
        %1103 = vmatpush1.msra.mxu0 0.0
        %1104 = vmatprep.subr.mxu0 0.0
        %1105 = vmatpush1.msra.mxu0 0.0
        %1106 = vmatprep.subr.mxu0 0.0
        %1107 = vmatpush1.msra.mxu0 0.0
        %1108 = vmatprep.subr.mxu0 0.0
        %1109 = vmatpush1.msra.mxu0 0.0
        %1110 = vmatprep.subr.mxu0 0.0
        %1111 = vmatpush1.msra.mxu0 0.0
        %1112 = vmatprep.subr.mxu0 0.0
        %1113 = vmatpush1.msra.mxu0 0.0
        %1114 = vmatprep.subr.mxu0 0.0
        %1115 = vmatpush1.msra.mxu0 0.0
        %1116 = vmatprep.subr.mxu0 0.0
        %1117 = vmatpush1.msra.mxu0 0.0
        %1118 = vmatprep.subr.mxu0 0.0
        %1119 = vmatpush1.msra.mxu0 0.0
        %1120 = vmatprep.subr.mxu0 0.0
        %1121 = vmatpush1.msra.mxu0 0.0
        %1122 = vmatprep.subr.mxu0 0.0
        %1123 = vmatpush1.msra.mxu0 0.0
        %1124 = vmatprep.subr.mxu0 0.0
        %1125 = vmatpush1.msra.mxu0 0.0
        %1126 = vmatprep.subr.mxu0 0.0
        %1127 = vmatpush1.msra.mxu0 0.0
        %1128 = vmatprep.subr.mxu0 0.0
        %1129 = vmatpush1.msra.mxu0 0.0
        %1130 = vmatprep.subr.mxu0 0.0
        %1131 = vmatpush1.msra.mxu0 0.0
        %1132 = vmatprep.subr.mxu0 0.0
        %1133 = vmatpush1.msra.mxu0 0.0
        %1134 = vmatprep.subr.mxu0 0.0
        %1135 = vmatpush1.msra.mxu0 0.0
        %1136 = vmatprep.subr.mxu0 0.0
        %1137 = vmatpush1.msra.mxu0 0.0
        %1138 = vmatprep.subr.mxu0 0.0
        %1139 = vmatpush1.msra.mxu0 0.0
        %1140 = vmatprep.subr.mxu0 0.0
        %1141 = vmatpush1.msra.mxu0 0.0
        %1142 = vmatprep.subr.mxu0 0.0
        %1143 = vmatpush1.msra.mxu0 0.0
        %1144 = vmatprep.subr.mxu0 0.0
        %1145 = vmatpush1.msra.mxu0 0.0
        %1146 = vmatprep.subr.mxu0 0.0
        %1147 = vmatpush1.msra.mxu0 0.0
        %1148 = vmatprep.subr.mxu0 0.0
        %1149 = vmatpush1.msra.mxu0 0.0
        %1150 = vmatprep.subr.mxu0 0.0
        %1151 = vmatpush1.msra.mxu0 0.0
        %1152 = vmatprep.mubr.f32.mxu0 0.0
        %1153 = vmatmul.mubr.f32.gmra.mrb[0].mxu0 %v1086
        %v1154 = vpop.f32.mrb[0].mxu0
        %v1155 = vadd.f32 0.0, %v1154
        %v1156 = vpop.f32.mrb[0].mxu0
        %1157 = vdwg.mxu0
        %1158 = vrot.lane.b32.xlu0 %v829, 112
        %v1159 = vpop.permute.xlu0 %1158
        %v1160 = vsel %vm832, %v1159, 0
        %1162 = vmatprep.subr.mxu0 0.0
        %1163 = vmatpush1.xpose.msra.mxu0 %v1160
        %1164 = vmatprep.subr.mxu0 0.0
        %1165 = vmatpush1.xpose.msra.mxu0 0.0
        %1166 = vmatprep.subr.mxu0 0.0
        %1167 = vmatpush1.xpose.msra.mxu0 0.0
        %1168 = vmatprep.subr.mxu0 0.0
        %1169 = vmatpush1.xpose.msra.mxu0 0.0
        %1170 = vmatprep.subr.mxu0 0.0
        %1171 = vmatpush1.xpose.msra.mxu0 0.0
        %1172 = vmatprep.subr.mxu0 0.0
        %1173 = vmatpush1.xpose.msra.mxu0 0.0
        %1174 = vmatprep.subr.mxu0 0.0
        %1175 = vmatpush1.xpose.msra.mxu0 0.0
        %1176 = vmatprep.subr.mxu0 0.0
        %1177 = vmatpush1.xpose.msra.mxu0 0.0
        %1178 = vmatprep.subr.mxu0 0.0
        %1179 = vmatpush1.xpose.msra.mxu0 0.0
        %1180 = vmatprep.subr.mxu0 0.0
        %1181 = vmatpush1.xpose.msra.mxu0 0.0
        %1182 = vmatprep.subr.mxu0 0.0
        %1183 = vmatpush1.xpose.msra.mxu0 0.0
        %1184 = vmatprep.subr.mxu0 0.0
        %1185 = vmatpush1.xpose.msra.mxu0 0.0
        %1186 = vmatprep.subr.mxu0 0.0
        %1187 = vmatpush1.xpose.msra.mxu0 0.0
        %1188 = vmatprep.subr.mxu0 0.0
        %1189 = vmatpush1.xpose.msra.mxu0 0.0
        %1190 = vmatprep.subr.mxu0 0.0
        %1191 = vmatpush1.xpose.msra.mxu0 0.0
        %1192 = vmatprep.subr.mxu0 0.0
        %1193 = vmatpush1.xpose.msra.mxu0 0.0
        %1194 = vmatprep.subr.mxu0 0.0
        %1195 = vmatpush1.xpose.msra.mxu0 0.0
        %1196 = vmatprep.subr.mxu0 0.0
        %1197 = vmatpush1.xpose.msra.mxu0 0.0
        %1198 = vmatprep.subr.mxu0 0.0
        %1199 = vmatpush1.xpose.msra.mxu0 0.0
        %1200 = vmatprep.subr.mxu0 0.0
        %1201 = vmatpush1.xpose.msra.mxu0 0.0
        %1202 = vmatprep.subr.mxu0 0.0
        %1203 = vmatpush1.xpose.msra.mxu0 0.0
        %1204 = vmatprep.subr.mxu0 0.0
        %1205 = vmatpush1.xpose.msra.mxu0 0.0
        %1206 = vmatprep.subr.mxu0 0.0
        %1207 = vmatpush1.xpose.msra.mxu0 0.0
        %1208 = vmatprep.subr.mxu0 0.0
        %1209 = vmatpush1.xpose.msra.mxu0 0.0
        %1210 = vmatprep.subr.mxu0 0.0
        %1211 = vmatpush1.xpose.msra.mxu0 0.0
        %1212 = vmatprep.subr.mxu0 0.0
        %1213 = vmatpush1.xpose.msra.mxu0 0.0
        %1214 = vmatprep.subr.mxu0 0.0
        %1215 = vmatpush1.xpose.msra.mxu0 0.0
        %1216 = vmatprep.subr.mxu0 0.0
        %1217 = vmatpush1.xpose.msra.mxu0 0.0
        %1218 = vmatprep.subr.mxu0 0.0
        %1219 = vmatpush1.xpose.msra.mxu0 0.0
        %1220 = vmatprep.subr.mxu0 0.0
        %1221 = vmatpush1.xpose.msra.mxu0 0.0
        %1222 = vmatprep.subr.mxu0 0.0
        %1223 = vmatpush1.xpose.msra.mxu0 0.0
        %1224 = vmatprep.subr.mxu0 0.0
        %1225 = vmatpush1.xpose.msra.mxu0 0.0
        %1226 = vmatprep.mubr.f32.mxu0 0.0
        %1227 = vmatmul.mubr.f32.gmra.mrb[0].mxu0 %v1160
        %v1228 = vpop.f32.mrb[0].mxu0
        %v1229 = vadd.f32 0.0, %v1228
        %v1230 = vpop.f32.mrb[0].mxu0
        %1231 = vdwg.mxu0
        %v1232 = vmul.f32 %v1229, 0.35355338
        %s1233 = scalar_lea.vmem %s687, 16
        %v1234 = vld [vmem:[%s1233] sm:$0xff]
        %v1235 = vmul.f32 %v1234, -1e+09
        %v1236 = vadd.f32 %v1232, %v1235
        %v1237 = vsel %vm832, %v1236, -inf
        %1238 = vmax.xlane.f32.xlu0 %v1237
        %v1239 = vpop.xlane.xlu0 %1238
        %v1240 = vsub.f32 %v1236, %v1239
        %v1241 = vmul.f32 %v1240, 1.442695
        %v1242 = vpow.pop %v1241
        %v1243 = vsel %vm832, %v1242, 0.0
        %1244 = vadd.xlane.f32.xlu0 %v1243
        %v1245 = vpop.xlane.xlu0 %1244
        %v1246 = vrcp.pop %v1245
        %v1247 = vmul.f32 %v1242, %v1246
        %v1250 = vsel %vm832, %v1247, 0
        %1252 = vmatprep.subr.mxu0 0.0
        %1253 = vmatpush1.msra.mxu0 %v1159
        %1254 = vmatprep.subr.mxu0 0.0
        %1255 = vmatpush1.msra.mxu0 0.0
        %1256 = vmatprep.subr.mxu0 0.0
        %1257 = vmatpush1.msra.mxu0 0.0
        %1258 = vmatprep.subr.mxu0 0.0
        %1259 = vmatpush1.msra.mxu0 0.0
        %1260 = vmatprep.subr.mxu0 0.0
        %1261 = vmatpush1.msra.mxu0 0.0
        %1262 = vmatprep.subr.mxu0 0.0
        %1263 = vmatpush1.msra.mxu0 0.0
        %1264 = vmatprep.subr.mxu0 0.0
        %1265 = vmatpush1.msra.mxu0 0.0
        %1266 = vmatprep.subr.mxu0 0.0
        %1267 = vmatpush1.msra.mxu0 0.0
        %1268 = vmatprep.subr.mxu0 0.0
        %1269 = vmatpush1.msra.mxu0 0.0
        %1270 = vmatprep.subr.mxu0 0.0
        %1271 = vmatpush1.msra.mxu0 0.0
        %1272 = vmatprep.subr.mxu0 0.0
        %1273 = vmatpush1.msra.mxu0 0.0
        %1274 = vmatprep.subr.mxu0 0.0
        %1275 = vmatpush1.msra.mxu0 0.0
        %1276 = vmatprep.subr.mxu0 0.0
        %1277 = vmatpush1.msra.mxu0 0.0
        %1278 = vmatprep.subr.mxu0 0.0
        %1279 = vmatpush1.msra.mxu0 0.0
        %1280 = vmatprep.subr.mxu0 0.0
        %1281 = vmatpush1.msra.mxu0 0.0
        %1282 = vmatprep.subr.mxu0 0.0
        %1283 = vmatpush1.msra.mxu0 0.0
        %1284 = vmatprep.subr.mxu0 0.0
        %1285 = vmatpush1.msra.mxu0 0.0
        %1286 = vmatprep.subr.mxu0 0.0
        %1287 = vmatpush1.msra.mxu0 0.0
        %1288 = vmatprep.subr.mxu0 0.0
        %1289 = vmatpush1.msra.mxu0 0.0
        %1290 = vmatprep.subr.mxu0 0.0
        %1291 = vmatpush1.msra.mxu0 0.0
        %1292 = vmatprep.subr.mxu0 0.0
        %1293 = vmatpush1.msra.mxu0 0.0
        %1294 = vmatprep.subr.mxu0 0.0
        %1295 = vmatpush1.msra.mxu0 0.0
        %1296 = vmatprep.subr.mxu0 0.0
        %1297 = vmatpush1.msra.mxu0 0.0
        %1298 = vmatprep.subr.mxu0 0.0
        %1299 = vmatpush1.msra.mxu0 0.0
        %1300 = vmatprep.subr.mxu0 0.0
        %1301 = vmatpush1.msra.mxu0 0.0
        %1302 = vmatprep.subr.mxu0 0.0
        %1303 = vmatpush1.msra.mxu0 0.0
        %1304 = vmatprep.subr.mxu0 0.0
        %1305 = vmatpush1.msra.mxu0 0.0
        %1306 = vmatprep.subr.mxu0 0.0
        %1307 = vmatpush1.msra.mxu0 0.0
        %1308 = vmatprep.subr.mxu0 0.0
        %1309 = vmatpush1.msra.mxu0 0.0
        %1310 = vmatprep.subr.mxu0 0.0
        %1311 = vmatpush1.msra.mxu0 0.0
        %1312 = vmatprep.subr.mxu0 0.0
        %1313 = vmatpush1.msra.mxu0 0.0
        %1314 = vmatprep.subr.mxu0 0.0
        %1315 = vmatpush1.msra.mxu0 0.0
        %1316 = vmatprep.mubr.f32.mxu0 0.0
        %1317 = vmatmul.mubr.f32.gmra.mrb[0].mxu0 %v1250
        %v1318 = vpop.f32.mrb[0].mxu0
        %v1319 = vadd.f32 0.0, %v1318
        %v1320 = vpop.f32.mrb[0].mxu0
        %1321 = vdwg.mxu0
        %1322 = vrot.lane.b32.xlu0 %v829, 104
        %v1323 = vpop.permute.xlu0 %1322
        %v1324 = vsel %vm832, %v1323, 0
        %1326 = vmatprep.subr.mxu0 0.0
        %1327 = vmatpush1.xpose.msra.mxu0 %v1324
        %1328 = vmatprep.subr.mxu0 0.0
        %1329 = vmatpush1.xpose.msra.mxu0 0.0
        %1330 = vmatprep.subr.mxu0 0.0
        %1331 = vmatpush1.xpose.msra.mxu0 0.0
        %1332 = vmatprep.subr.mxu0 0.0
        %1333 = vmatpush1.xpose.msra.mxu0 0.0
        %1334 = vmatprep.subr.mxu0 0.0
        %1335 = vmatpush1.xpose.msra.mxu0 0.0
        %1336 = vmatprep.subr.mxu0 0.0
        %1337 = vmatpush1.xpose.msra.mxu0 0.0
        %1338 = vmatprep.subr.mxu0 0.0
        %1339 = vmatpush1.xpose.msra.mxu0 0.0
        %1340 = vmatprep.subr.mxu0 0.0
        %1341 = vmatpush1.xpose.msra.mxu0 0.0
        %1342 = vmatprep.subr.mxu0 0.0
        %1343 = vmatpush1.xpose.msra.mxu0 0.0
        %1344 = vmatprep.subr.mxu0 0.0
        %1345 = vmatpush1.xpose.msra.mxu0 0.0
        %1346 = vmatprep.subr.mxu0 0.0
        %1347 = vmatpush1.xpose.msra.mxu0 0.0
        %1348 = vmatprep.subr.mxu0 0.0
        %1349 = vmatpush1.xpose.msra.mxu0 0.0
        %1350 = vmatprep.subr.mxu0 0.0
        %1351 = vmatpush1.xpose.msra.mxu0 0.0
        %1352 = vmatprep.subr.mxu0 0.0
        %1353 = vmatpush1.xpose.msra.mxu0 0.0
        %1354 = vmatprep.subr.mxu0 0.0
        %1355 = vmatpush1.xpose.msra.mxu0 0.0
        %1356 = vmatprep.subr.mxu0 0.0
        %1357 = vmatpush1.xpose.msra.mxu0 0.0
        %1358 = vmatprep.subr.mxu0 0.0
        %1359 = vmatpush1.xpose.msra.mxu0 0.0
        %1360 = vmatprep.subr.mxu0 0.0
        %1361 = vmatpush1.xpose.msra.mxu0 0.0
        %1362 = vmatprep.subr.mxu0 0.0
        %1363 = vmatpush1.xpose.msra.mxu0 0.0
        %1364 = vmatprep.subr.mxu0 0.0
        %1365 = vmatpush1.xpose.msra.mxu0 0.0
        %1366 = vmatprep.subr.mxu0 0.0
        %1367 = vmatpush1.xpose.msra.mxu0 0.0
        %1368 = vmatprep.subr.mxu0 0.0
        %1369 = vmatpush1.xpose.msra.mxu0 0.0
        %1370 = vmatprep.subr.mxu0 0.0
        %1371 = vmatpush1.xpose.msra.mxu0 0.0
        %1372 = vmatprep.subr.mxu0 0.0
        %1373 = vmatpush1.xpose.msra.mxu0 0.0
        %1374 = vmatprep.subr.mxu0 0.0
        %1375 = vmatpush1.xpose.msra.mxu0 0.0
        %1376 = vmatprep.subr.mxu0 0.0
        %1377 = vmatpush1.xpose.msra.mxu0 0.0
        %1378 = vmatprep.subr.mxu0 0.0
        %1379 = vmatpush1.xpose.msra.mxu0 0.0
        %1380 = vmatprep.subr.mxu0 0.0
        %1381 = vmatpush1.xpose.msra.mxu0 0.0
        %1382 = vmatprep.subr.mxu0 0.0
        %1383 = vmatpush1.xpose.msra.mxu0 0.0
        %1384 = vmatprep.subr.mxu0 0.0
        %1385 = vmatpush1.xpose.msra.mxu0 0.0
        %1386 = vmatprep.subr.mxu0 0.0
        %1387 = vmatpush1.xpose.msra.mxu0 0.0
        %1388 = vmatprep.subr.mxu0 0.0
        %1389 = vmatpush1.xpose.msra.mxu0 0.0
        %1390 = vmatprep.mubr.f32.mxu0 0.0
        %1391 = vmatmul.mubr.f32.gmra.mrb[0].mxu0 %v1324
        %v1392 = vpop.f32.mrb[0].mxu0
        %v1393 = vadd.f32 0.0, %v1392
        %v1394 = vpop.f32.mrb[0].mxu0
        %1395 = vdwg.mxu0
        %v1396 = vmul.f32 %v1393, 0.35355338
        %s1397 = scalar_lea.vmem %s687, 24
        %v1398 = vld [vmem:[%s1397] sm:$0xff]
        %v1399 = vmul.f32 %v1398, -1e+09
        %v1400 = vadd.f32 %v1396, %v1399
        %v1401 = vsel %vm832, %v1400, -inf
        %1402 = vmax.xlane.f32.xlu0 %v1401
        %v1403 = vpop.xlane.xlu0 %1402
        %v1404 = vsub.f32 %v1400, %v1403
        %v1405 = vmul.f32 %v1404, 1.442695
        %v1406 = vpow.pop %v1405
        %v1407 = vsel %vm832, %v1406, 0.0
        %1408 = vadd.xlane.f32.xlu0 %v1407
        %v1409 = vpop.xlane.xlu0 %1408
        %v1410 = vrcp.pop %v1409
        %v1411 = vmul.f32 %v1406, %v1410
        %v1414 = vsel %vm832, %v1411, 0
        %1416 = vmatprep.subr.mxu0 0.0
        %1417 = vmatpush1.msra.mxu0 %v1323
        %1418 = vmatprep.subr.mxu0 0.0
        %1419 = vmatpush1.msra.mxu0 0.0
        %1420 = vmatprep.subr.mxu0 0.0
        %1421 = vmatpush1.msra.mxu0 0.0
        %1422 = vmatprep.subr.mxu0 0.0
        %1423 = vmatpush1.msra.mxu0 0.0
        %1424 = vmatprep.subr.mxu0 0.0
        %1425 = vmatpush1.msra.mxu0 0.0
        %1426 = vmatprep.subr.mxu0 0.0
        %1427 = vmatpush1.msra.mxu0 0.0
        %1428 = vmatprep.subr.mxu0 0.0
        %1429 = vmatpush1.msra.mxu0 0.0
        %1430 = vmatprep.subr.mxu0 0.0
        %1431 = vmatpush1.msra.mxu0 0.0
        %1432 = vmatprep.subr.mxu0 0.0
        %1433 = vmatpush1.msra.mxu0 0.0
        %1434 = vmatprep.subr.mxu0 0.0
        %1435 = vmatpush1.msra.mxu0 0.0
        %1436 = vmatprep.subr.mxu0 0.0
        %1437 = vmatpush1.msra.mxu0 0.0
        %1438 = vmatprep.subr.mxu0 0.0
        %1439 = vmatpush1.msra.mxu0 0.0
        %1440 = vmatprep.subr.mxu0 0.0
        %1441 = vmatpush1.msra.mxu0 0.0
        %1442 = vmatprep.subr.mxu0 0.0
        %1443 = vmatpush1.msra.mxu0 0.0
        %1444 = vmatprep.subr.mxu0 0.0
        %1445 = vmatpush1.msra.mxu0 0.0
        %1446 = vmatprep.subr.mxu0 0.0
        %1447 = vmatpush1.msra.mxu0 0.0
        %1448 = vmatprep.subr.mxu0 0.0
        %1449 = vmatpush1.msra.mxu0 0.0
        %1450 = vmatprep.subr.mxu0 0.0
        %1451 = vmatpush1.msra.mxu0 0.0
        %1452 = vmatprep.subr.mxu0 0.0
        %1453 = vmatpush1.msra.mxu0 0.0
        %1454 = vmatprep.subr.mxu0 0.0
        %1455 = vmatpush1.msra.mxu0 0.0
        %1456 = vmatprep.subr.mxu0 0.0
        %1457 = vmatpush1.msra.mxu0 0.0
        %1458 = vmatprep.subr.mxu0 0.0
        %1459 = vmatpush1.msra.mxu0 0.0
        %1460 = vmatprep.subr.mxu0 0.0
        %1461 = vmatpush1.msra.mxu0 0.0
        %1462 = vmatprep.subr.mxu0 0.0
        %1463 = vmatpush1.msra.mxu0 0.0
        %1464 = vmatprep.subr.mxu0 0.0
        %1465 = vmatpush1.msra.mxu0 0.0
        %1466 = vmatprep.subr.mxu0 0.0
        %1467 = vmatpush1.msra.mxu0 0.0
        %1468 = vmatprep.subr.mxu0 0.0
        %1469 = vmatpush1.msra.mxu0 0.0
        %1470 = vmatprep.subr.mxu0 0.0
        %1471 = vmatpush1.msra.mxu0 0.0
        %1472 = vmatprep.subr.mxu0 0.0
        %1473 = vmatpush1.msra.mxu0 0.0
        %1474 = vmatprep.subr.mxu0 0.0
        %1475 = vmatpush1.msra.mxu0 0.0
        %1476 = vmatprep.subr.mxu0 0.0
        %1477 = vmatpush1.msra.mxu0 0.0
        %1478 = vmatprep.subr.mxu0 0.0
        %1479 = vmatpush1.msra.mxu0 0.0
        %1480 = vmatprep.mubr.f32.mxu0 0.0
        %1481 = vmatmul.mubr.f32.gmra.mrb[0].mxu0 %v1414
        %v1482 = vpop.f32.mrb[0].mxu0
        %v1483 = vadd.f32 0.0, %v1482
        %v1484 = vpop.f32.mrb[0].mxu0
        %1485 = vdwg.mxu0
        %1487 = vrot.lane.b32.xlu0 %v1155, 8
        %v1488 = vpop.permute.xlu0 %1487
        %1491 = vrot.lane.b32.xlu0 %v1319, 16
        %v1492 = vpop.permute.xlu0 %1491
        %1495 = vrot.lane.b32.xlu0 %v1483, 24
        %v1496 = vpop.permute.xlu0 %1495
        %v1498 = vsel %vm832, %v991, %v1488
        %vm1499 = vcmask 130048
        %v1500 = vsel %vm1499, %v1498, %v1492
        %vm1501 = vcmask 195584
        %v1502 = vsel %vm1501, %v1500, %v1496
        %v1503 = vld [vmem:[%s700] sm:$0xff]
        %v1504 = vld [vmem:[%s700 + $0x8] sm:$0xff]
        %v1505 = vld [vmem:[%s700 + $0x10] sm:$0xff]
        %v1506 = vld [vmem:[%s700 + $0x18] sm:$0xff]
        %v1507 = vld [vmem:[%s703] sm:$0x1]
        %v1509 = vlaneseq
        %v1510 = vshrl.u32 %v1509, 7
        %v1511 = vsub.s32 0, %v1510
        %v1512 = vrot.slane %v1507, %v1511
        %v1515 = vsel %vm746, %v1502, 0
        %v1518 = vsel %vm746, %v1503, 0
        %v1521 = vsel %vm746, %v1504, 0
        %v1524 = vsel %vm746, %v1505, 0
        %v1527 = vsel %vm746, %v1506, 0
        %1529 = vmatprep.subr.mxu0 0.0
        %1530 = vmatpush1.xpose.msra.mxu0 %v1518
        %1531 = vmatprep.subr.mxu0 0.0
        %1532 = vmatpush1.xpose.msra.mxu0 %v1521
        %1533 = vmatprep.subr.mxu0 0.0
        %1534 = vmatpush1.xpose.msra.mxu0 %v1524
        %1535 = vmatprep.subr.mxu0 0.0
        %1536 = vmatpush1.xpose.msra.mxu0 %v1527
        %1537 = vmatprep.subr.mxu0 0.0
        %1538 = vmatpush1.xpose.msra.mxu0 0.0
        %1539 = vmatprep.subr.mxu0 0.0
        %1540 = vmatpush1.xpose.msra.mxu0 0.0
        %1541 = vmatprep.subr.mxu0 0.0
        %1542 = vmatpush1.xpose.msra.mxu0 0.0
        %1543 = vmatprep.subr.mxu0 0.0
        %1544 = vmatpush1.xpose.msra.mxu0 0.0
        %1545 = vmatprep.subr.mxu0 0.0
        %1546 = vmatpush1.xpose.msra.mxu0 0.0
        %1547 = vmatprep.subr.mxu0 0.0
        %1548 = vmatpush1.xpose.msra.mxu0 0.0
        %1549 = vmatprep.subr.mxu0 0.0
        %1550 = vmatpush1.xpose.msra.mxu0 0.0
        %1551 = vmatprep.subr.mxu0 0.0
        %1552 = vmatpush1.xpose.msra.mxu0 0.0
        %1553 = vmatprep.subr.mxu0 0.0
        %1554 = vmatpush1.xpose.msra.mxu0 0.0
        %1555 = vmatprep.subr.mxu0 0.0
        %1556 = vmatpush1.xpose.msra.mxu0 0.0
        %1557 = vmatprep.subr.mxu0 0.0
        %1558 = vmatpush1.xpose.msra.mxu0 0.0
        %1559 = vmatprep.subr.mxu0 0.0
        %1560 = vmatpush1.xpose.msra.mxu0 0.0
        %1561 = vmatprep.subr.mxu0 0.0
        %1562 = vmatpush1.xpose.msra.mxu0 0.0
        %1563 = vmatprep.subr.mxu0 0.0
        %1564 = vmatpush1.xpose.msra.mxu0 0.0
        %1565 = vmatprep.subr.mxu0 0.0
        %1566 = vmatpush1.xpose.msra.mxu0 0.0
        %1567 = vmatprep.subr.mxu0 0.0
        %1568 = vmatpush1.xpose.msra.mxu0 0.0
        %1569 = vmatprep.subr.mxu0 0.0
        %1570 = vmatpush1.xpose.msra.mxu0 0.0
        %1571 = vmatprep.subr.mxu0 0.0
        %1572 = vmatpush1.xpose.msra.mxu0 0.0
        %1573 = vmatprep.subr.mxu0 0.0
        %1574 = vmatpush1.xpose.msra.mxu0 0.0
        %1575 = vmatprep.subr.mxu0 0.0
        %1576 = vmatpush1.xpose.msra.mxu0 0.0
        %1577 = vmatprep.subr.mxu0 0.0
        %1578 = vmatpush1.xpose.msra.mxu0 0.0
        %1579 = vmatprep.subr.mxu0 0.0
        %1580 = vmatpush1.xpose.msra.mxu0 0.0
        %1581 = vmatprep.subr.mxu0 0.0
        %1582 = vmatpush1.xpose.msra.mxu0 0.0
        %1583 = vmatprep.subr.mxu0 0.0
        %1584 = vmatpush1.xpose.msra.mxu0 0.0
        %1585 = vmatprep.subr.mxu0 0.0
        %1586 = vmatpush1.xpose.msra.mxu0 0.0
        %1587 = vmatprep.subr.mxu0 0.0
        %1588 = vmatpush1.xpose.msra.mxu0 0.0
        %1589 = vmatprep.subr.mxu0 0.0
        %1590 = vmatpush1.xpose.msra.mxu0 0.0
        %1591 = vmatprep.subr.mxu0 0.0
        %1592 = vmatpush1.xpose.msra.mxu0 0.0
        %1593 = vmatprep.mubr.f32.mxu0 0.0
        %1594 = vmatmul.mubr.f32.gmra.mrb[0].mxu0 %v1515
        %v1595 = vpop.f32.mrb[0].mxu0
        %v1596 = vadd.f32 %v1512, %v1595
        %v1597 = vpop.f32.mrb[0].mxu0
        %1598 = vdwg.mxu0
        %v1599 = vadd.f32 %v734, %v1596
        %v1600 = vsel %vm746, %v1599, 0.0
        %1601 = vadd.xlane.f32.xlu0 %v1600
        %v1602 = vpop.xlane.xlu0 %1601
        %v1603 = vrcp.pop 32.0
        %v1604 = vmul.f32 %v1602, %v1603
        %v1605 = vsub.f32 %v1599, %v1604
        %v1606 = vmul.f32 %v1605, %v1605
        %v1607 = vsel %vm746, %v1606, 0.0
        %1608 = vadd.xlane.f32.xlu0 %v1607
        %v1609 = vpop.xlane.xlu0 %1608
        %v1610 = vmul.f32 %v1609, %v1603
        %v1611 = vadd.f32 %v1610, 1e-05
        %v1612 = vrsqrt.pop %v1611
        %v1613 = vmul.f32 %v1605, %v1612
        %v1614 = vld [vmem:[%s706] sm:$0x1]
        %v1616 = vlaneseq
        %v1617 = vshrl.u32 %v1616, 7
        %v1618 = vsub.s32 0, %v1617
        %v1619 = vrot.slane %v1614, %v1618
        %v1621 = vmul.f32 %v1613, %v1619
        %v1622 = vld [vmem:[%s709] sm:$0x1]
        %v1624 = vlaneseq
        %v1625 = vshrl.u32 %v1624, 7
        %v1626 = vsub.s32 0, %v1625
        %v1627 = vrot.slane %v1622, %v1626
        %v1629 = vadd.f32 %v1621, %v1627
        %v1630 = vld [vmem:[%s714] sm:$0xff]
        %v1631 = vld [vmem:[%s714 + $0x8] sm:$0xff]
        %v1632 = vld [vmem:[%s714 + $0x10] sm:$0xff]
        %v1633 = vld [vmem:[%s714 + $0x18] sm:$0xff]
        %v1634 = vld [vmem:[%s714 + $0x20] sm:$0xff]
        %v1635 = vld [vmem:[%s714 + $0x28] sm:$0xff]
        %v1636 = vld [vmem:[%s714 + $0x30] sm:$0xff]
        %v1637 = vld [vmem:[%s714 + $0x38] sm:$0xff]
        %v1638 = vld [vmem:[%s717] sm:$0x1]
        %v1640 = vlaneseq
        %v1641 = vshrl.u32 %v1640, 7
        %v1642 = vsub.s32 0, %v1641
        %v1643 = vrot.slane %v1638, %v1642
        %v1646 = vsel %vm746, %v1629, 0
        %v1649 = vsel %vm746, %v1630, 0
        %v1652 = vsel %vm746, %v1631, 0
        %v1655 = vsel %vm746, %v1632, 0
        %v1658 = vsel %vm746, %v1633, 0
        %v1661 = vsel %vm746, %v1634, 0
        %v1664 = vsel %vm746, %v1635, 0
        %v1667 = vsel %vm746, %v1636, 0
        %v1670 = vsel %vm746, %v1637, 0
        %1672 = vmatprep.subr.mxu0 0.0
        %1673 = vmatpush1.xpose.msra.mxu0 %v1649
        %1674 = vmatprep.subr.mxu0 0.0
        %1675 = vmatpush1.xpose.msra.mxu0 %v1652
        %1676 = vmatprep.subr.mxu0 0.0
        %1677 = vmatpush1.xpose.msra.mxu0 %v1655
        %1678 = vmatprep.subr.mxu0 0.0
        %1679 = vmatpush1.xpose.msra.mxu0 %v1658
        %1680 = vmatprep.subr.mxu0 0.0
        %1681 = vmatpush1.xpose.msra.mxu0 %v1661
        %1682 = vmatprep.subr.mxu0 0.0
        %1683 = vmatpush1.xpose.msra.mxu0 %v1664
        %1684 = vmatprep.subr.mxu0 0.0
        %1685 = vmatpush1.xpose.msra.mxu0 %v1667
        %1686 = vmatprep.subr.mxu0 0.0
        %1687 = vmatpush1.xpose.msra.mxu0 %v1670
        %1688 = vmatprep.subr.mxu0 0.0
        %1689 = vmatpush1.xpose.msra.mxu0 0.0
        %1690 = vmatprep.subr.mxu0 0.0
        %1691 = vmatpush1.xpose.msra.mxu0 0.0
        %1692 = vmatprep.subr.mxu0 0.0
        %1693 = vmatpush1.xpose.msra.mxu0 0.0
        %1694 = vmatprep.subr.mxu0 0.0
        %1695 = vmatpush1.xpose.msra.mxu0 0.0
        %1696 = vmatprep.subr.mxu0 0.0
        %1697 = vmatpush1.xpose.msra.mxu0 0.0
        %1698 = vmatprep.subr.mxu0 0.0
        %1699 = vmatpush1.xpose.msra.mxu0 0.0
        %1700 = vmatprep.subr.mxu0 0.0
        %1701 = vmatpush1.xpose.msra.mxu0 0.0
        %1702 = vmatprep.subr.mxu0 0.0
        %1703 = vmatpush1.xpose.msra.mxu0 0.0
        %1704 = vmatprep.subr.mxu0 0.0
        %1705 = vmatpush1.xpose.msra.mxu0 0.0
        %1706 = vmatprep.subr.mxu0 0.0
        %1707 = vmatpush1.xpose.msra.mxu0 0.0
        %1708 = vmatprep.subr.mxu0 0.0
        %1709 = vmatpush1.xpose.msra.mxu0 0.0
        %1710 = vmatprep.subr.mxu0 0.0
        %1711 = vmatpush1.xpose.msra.mxu0 0.0
        %1712 = vmatprep.subr.mxu0 0.0
        %1713 = vmatpush1.xpose.msra.mxu0 0.0
        %1714 = vmatprep.subr.mxu0 0.0
        %1715 = vmatpush1.xpose.msra.mxu0 0.0
        %1716 = vmatprep.subr.mxu0 0.0
        %1717 = vmatpush1.xpose.msra.mxu0 0.0
        %1718 = vmatprep.subr.mxu0 0.0
        %1719 = vmatpush1.xpose.msra.mxu0 0.0
        %1720 = vmatprep.subr.mxu0 0.0
        %1721 = vmatpush1.xpose.msra.mxu0 0.0
        %1722 = vmatprep.subr.mxu0 0.0
        %1723 = vmatpush1.xpose.msra.mxu0 0.0
        %1724 = vmatprep.subr.mxu0 0.0
        %1725 = vmatpush1.xpose.msra.mxu0 0.0
        %1726 = vmatprep.subr.mxu0 0.0
        %1727 = vmatpush1.xpose.msra.mxu0 0.0
        %1728 = vmatprep.subr.mxu0 0.0
        %1729 = vmatpush1.xpose.msra.mxu0 0.0
        %1730 = vmatprep.subr.mxu0 0.0
        %1731 = vmatpush1.xpose.msra.mxu0 0.0
        %1732 = vmatprep.subr.mxu0 0.0
        %1733 = vmatpush1.xpose.msra.mxu0 0.0
        %1734 = vmatprep.subr.mxu0 0.0
        %1735 = vmatpush1.xpose.msra.mxu0 0.0
        %1736 = vmatprep.mubr.f32.mxu0 0.0
        %1737 = vmatmul.mubr.f32.gmra.mrb[0].mxu0 %v1646
        %v1738 = vpop.f32.mrb[0].mxu0
        %v1739 = vadd.f32 %v1643, %v1738
        %v1740 = vpop.f32.mrb[0].mxu0
        %1741 = vdwg.mxu0
        %v1742 = vmax.f32 %v1739, 0.0
        %v1743 = vld [vmem:[%s589] sm:$0xff]
        %v1744 = vld [vmem:[%s589 + $0x8] sm:$0xff]
        %v1745 = vld [vmem:[%s589 + $0x10] sm:$0xff]
        %v1746 = vld [vmem:[%s589 + $0x18] sm:$0xff]
        %v1747 = vld [vmem:[%s720] sm:$0x1]
        %v1749 = vlaneseq
        %v1750 = vshrl.u32 %v1749, 7
        %v1751 = vsub.s32 0, %v1750
        %v1752 = vrot.slane %v1747, %v1751
        %vm1754 = vcmask 523264
        %v1756 = vsel %vm1754, %v1742, 0
        %v1759 = vsel %vm1754, %v1743, 0
        %v1762 = vsel %vm1754, %v1744, 0
        %v1765 = vsel %vm1754, %v1745, 0
        %v1768 = vsel %vm1754, %v1746, 0
        %1770 = vmatprep.subr.mxu0 0.0
        %1771 = vmatpush1.xpose.msra.mxu0 %v1759
        %1772 = vmatprep.subr.mxu0 0.0
        %1773 = vmatpush1.xpose.msra.mxu0 %v1762
        %1774 = vmatprep.subr.mxu0 0.0
        %1775 = vmatpush1.xpose.msra.mxu0 %v1765
        %1776 = vmatprep.subr.mxu0 0.0
        %1777 = vmatpush1.xpose.msra.mxu0 %v1768
        %1778 = vmatprep.subr.mxu0 0.0
        %1779 = vmatpush1.xpose.msra.mxu0 0.0
        %1780 = vmatprep.subr.mxu0 0.0
        %1781 = vmatpush1.xpose.msra.mxu0 0.0
        %1782 = vmatprep.subr.mxu0 0.0
        %1783 = vmatpush1.xpose.msra.mxu0 0.0
        %1784 = vmatprep.subr.mxu0 0.0
        %1785 = vmatpush1.xpose.msra.mxu0 0.0
        %1786 = vmatprep.subr.mxu0 0.0
        %1787 = vmatpush1.xpose.msra.mxu0 0.0
        %1788 = vmatprep.subr.mxu0 0.0
        %1789 = vmatpush1.xpose.msra.mxu0 0.0
        %1790 = vmatprep.subr.mxu0 0.0
        %1791 = vmatpush1.xpose.msra.mxu0 0.0
        %1792 = vmatprep.subr.mxu0 0.0
        %1793 = vmatpush1.xpose.msra.mxu0 0.0
        %1794 = vmatprep.subr.mxu0 0.0
        %1795 = vmatpush1.xpose.msra.mxu0 0.0
        %1796 = vmatprep.subr.mxu0 0.0
        %1797 = vmatpush1.xpose.msra.mxu0 0.0
        %1798 = vmatprep.subr.mxu0 0.0
        %1799 = vmatpush1.xpose.msra.mxu0 0.0
        %1800 = vmatprep.subr.mxu0 0.0
        %1801 = vmatpush1.xpose.msra.mxu0 0.0
        %1802 = vmatprep.subr.mxu0 0.0
        %1803 = vmatpush1.xpose.msra.mxu0 0.0
        %1804 = vmatprep.subr.mxu0 0.0
        %1805 = vmatpush1.xpose.msra.mxu0 0.0
        %1806 = vmatprep.subr.mxu0 0.0
        %1807 = vmatpush1.xpose.msra.mxu0 0.0
        %1808 = vmatprep.subr.mxu0 0.0
        %1809 = vmatpush1.xpose.msra.mxu0 0.0
        %1810 = vmatprep.subr.mxu0 0.0
        %1811 = vmatpush1.xpose.msra.mxu0 0.0
        %1812 = vmatprep.subr.mxu0 0.0
        %1813 = vmatpush1.xpose.msra.mxu0 0.0
        %1814 = vmatprep.subr.mxu0 0.0
        %1815 = vmatpush1.xpose.msra.mxu0 0.0
        %1816 = vmatprep.subr.mxu0 0.0
        %1817 = vmatpush1.xpose.msra.mxu0 0.0
        %1818 = vmatprep.subr.mxu0 0.0
        %1819 = vmatpush1.xpose.msra.mxu0 0.0
        %1820 = vmatprep.subr.mxu0 0.0
        %1821 = vmatpush1.xpose.msra.mxu0 0.0
        %1822 = vmatprep.subr.mxu0 0.0
        %1823 = vmatpush1.xpose.msra.mxu0 0.0
        %1824 = vmatprep.subr.mxu0 0.0
        %1825 = vmatpush1.xpose.msra.mxu0 0.0
        %1826 = vmatprep.subr.mxu0 0.0
        %1827 = vmatpush1.xpose.msra.mxu0 0.0
        %1828 = vmatprep.subr.mxu0 0.0
        %1829 = vmatpush1.xpose.msra.mxu0 0.0
        %1830 = vmatprep.subr.mxu0 0.0
        %1831 = vmatpush1.xpose.msra.mxu0 0.0
        %1832 = vmatprep.subr.mxu0 0.0
        %1833 = vmatpush1.xpose.msra.mxu0 0.0
        %1834 = vmatprep.mubr.f32.mxu0 0.0
        %1835 = vmatmul.mubr.f32.gmra.mrb[0].mxu0 %v1756
        %v1836 = vpop.f32.mrb[0].mxu0
        %v1837 = vadd.f32 %v1752, %v1836
        %v1838 = vpop.f32.mrb[0].mxu0
        %1839 = vdwg.mxu0
        %v1840 = vadd.f32 %v1629, %v1837
        %v1841 = vsel %vm746, %v1840, 0.0
        %1842 = vadd.xlane.f32.xlu0 %v1841
        %v1843 = vpop.xlane.xlu0 %1842
        %v1844 = vmul.f32 %v1843, %v1603
        %v1845 = vsub.f32 %v1840, %v1844
        %v1846 = vmul.f32 %v1845, %v1845
        %v1847 = vsel %vm746, %v1846, 0.0
        %1848 = vadd.xlane.f32.xlu0 %v1847
        %v1849 = vpop.xlane.xlu0 %1848
        %v1850 = vmul.f32 %v1849, %v1603
        %v1851 = vadd.f32 %v1850, 1e-05
        %v1852 = vrsqrt.pop %v1851
        %v1853 = vmul.f32 %v1845, %v1852
        %v1854 = vld [vmem:[%s723] sm:$0x1]
        %v1856 = vlaneseq
        %v1857 = vshrl.u32 %v1856, 7
        %v1858 = vsub.s32 0, %v1857
        %v1859 = vrot.slane %v1854, %v1858
        %v1861 = vmul.f32 %v1853, %v1859
        %v1862 = vld [vmem:[%s726] sm:$0x1]
        %v1864 = vlaneseq
        %v1865 = vshrl.u32 %v1864, 7
        %v1866 = vsub.s32 0, %v1865
        %v1867 = vrot.slane %v1862, %v1866
        %v1869 = vadd.f32 %v1861, %v1867
        %1870 = vst.msk [vmem:[%s682] sm:$0xff] %vm746, %v1869
        %s1871 = sand.u32 %s418, 1
        %s1872 = scalar_lea.sflag [#allocation4], %s1871
        %s1873 = sand.u32 %s418, 1
        %s1874 = smul.addr %s1873, 8
        %s1875 = scalar_lea.vmem [#allocation7], %s1874
        // Predicated region
        $region89: #{tpu_custom_call.1} parent=75 // pred_check
          %p1876 = pneg %p428
        $region90: #{tpu_custom_call.1} parent=75 // pred_check_branch
          %1878 = sbr.rel (%p1876) target = $region92
        $region91: #{tpu_custom_call.1} parent=75 // pred_region
          %s1880 = ssub.s32 128, 128
          %1881 = vsyncadd %s1872, %s1880
          %s1882 = smul.addr %s38, 128
          %s1883 = scalar_lea.hbm %s14, %s1882
          %s1885 = sshll.u32 %s1875, 4
          %s1886 = int_to_ptr.vmem [resolvable:$true] %s1885
          %1888 = dma.vmem_to_hbm [thread:$0]  %s1886, 128, %s1883, %s1872
        $region92: #{tpu_custom_call.1} parent=75 // pred_fallthru
          _
      $region76: #{tpu_custom_call.1} parent=5 // pred_fallthru
        _
      %p1889 = scmp.le.s32.totalorder 2, %s29
      // Predicated region
      $region93: #{tpu_custom_call.1} parent=5 // pred_check
        %p1890 = pneg %p1889
      $region94: #{tpu_custom_call.1} parent=5 // pred_check_branch
        %1892 = sbr.rel (%p1890) target = $region96
      $region95: #{tpu_custom_call.1} parent=5 // pred_region
        %s1893 = ssub.s32 %s29, 2
        // Predicated region
        $region97: #{tpu_custom_call.1} parent=95 // pred_check
          %p1894 = pneg %p434
        $region98: #{tpu_custom_call.1} parent=95 // pred_check_branch
          %1896 = sbr.rel (%p1894) target = $region100
        $region99: #{tpu_custom_call.1} parent=95 // pred_region
          %s1897 = sand.u32 %s419, 1
          %s1898 = scalar_lea.sflag [#allocation4], %s1897
          %s1899 = sand.u32 %s419, 1
          %s1900 = smul.addr %s1899, 8
          %s1901 = scalar_lea.vmem [#allocation7], %s1900
          %1902 = dma.done %s1898, 128
        $region100: #{tpu_custom_call.1} parent=95 // pred_fallthru
          _
      $region96: #{tpu_custom_call.1} parent=5 // pred_fallthru
        _
    $region6: #{tpu_custom_call.1} parent=1 // loop_footer
      %s33 = sadd.s32 1, %s29
    $region7: #{tpu_custom_call.1} parent=1 // loop_footer_branch
      %28 = sbr.rel target = $region3
    $region8: #{tpu_custom_call.1} parent=1 // loop_exit
      _
    %1903 = vsyncpa [#allocation3], 1
    %s1904 = scalar_lea.sflag [#allocation3], 1
    %1905 = vsyncpa %s1904, 1
    %1906 = vsyncpa [#allocation6], 1
    %s1907 = scalar_lea.sflag [#allocation6], 1
    %1908 = vsyncpa %s1907, 1
    %1909 = vsyncpa [#allocation4], 1
    %s1910 = scalar_lea.sflag [#allocation4], 1
    %1911 = vsyncpa %s1910, 1

</llo_original>
